<compile_context>
chip_gen: v5e
topology: v5e:2x2
jax: 0.10.0
libtpu: 0.0.40
codegen_flags: <defaults>
</compile_context>

<pallas_src>
import math

import jax
import jax.numpy as jnp
from jax.experimental import pallas as pl
from jax.experimental.pallas import tpu as pltpu

# ---- logical (synthetic) model config ----
B, S, H, I, VOCAB = 2, 8, 32, 64, 100
G_TRIPLET = 3                      # anchors / positives / negatives
GB_MAX = G_TRIPLET * B             # max folded (group*batch) rows = 6
# ---- lane-padded (TPU) config ----
HP, IP, VP = 128, 128, 128
EPS_LN = 1e-12
EPS_NORM = 1e-12                   # torch.nn.functional.normalize default eps
NEG_BIG = -1e9

# Vector-slab row layout (every row is HP = 128 wide, float32).
R_POS0 = 0                                   # rows 0 .. S-1: position embeds
R_LN0G, R_LN0B = 8, 9
R_BQ, R_BK, R_BV, R_BO = 10, 11, 12, 13
R_LN1G, R_LN1B = 14, 15
R_B1, R_B2 = 16, 17
R_LN2G, R_LN2B = 18, 19
R_BP = 20
R_BLK = 24                                   # block-diagonal attention bias rows
VEC_ROWS = R_BLK + GB_MAX * S                # 72

# Matrix-slab column layout: [wq | wk | wv | wo | w1 | w2 | wp], HP cols each.
C_QKV, C_WO, C_W1, C_W2, C_WP = 0, 3 * HP, 4 * HP, 5 * HP, 6 * HP


def _layer_norm_padded(v, g, b):
    """LayerNorm over the logical H lanes.

    Padded lanes carry v == 0, g == 0, b == 0, so they stay exactly zero and
    the mean / variance computed from full-lane sums equal the H-lane stats.
    Variance is clamped at 0 (E[x^2]-mu^2 can round slightly negative).
    """
    s1 = jnp.sum(v, axis=-1, keepdims=True)
    s2 = jnp.sum(v * v, axis=-1, keepdims=True)
    mu = s1 * (1.0 / H)
    var = jnp.maximum(s2 * (1.0 / H) - mu * mu, 0.0)
    return (v - mu) * jax.lax.rsqrt(var + EPS_LN) * g + b


def encoder_kernel(ids_ref, mask_ref, wemb_ref, wmat_ref, vecs_ref, out_ref):
    N = ids_ref.shape[0]            # folded rows = groups * batch * seq
    GB = N // S                     # folded (group, batch) sequences

    vecs = vecs_ref[...]                                 # (VEC_ROWS, HP) f32
    row = lambda r: vecs[r:r + 1, :]                     # (1, HP) static slice

    # ---- attention bias (hoisted off the QKV/scores critical path) ----
    # Block-diagonal structural bias (queries attend only within their own
    # (group, batch) sequence) is a constant slab block; key-padding bias
    # comes from the attention mask.
    blockbias = vecs[R_BLK:R_BLK + N, 0:N]               # (N, N)
    keybias = jnp.where(mask_ref[...] > 0, 0.0, NEG_BIG)  # (1, N)
    bias = blockbias + keybias                           # (N, N)

    # ---- embedding gather as one-hot MXU matmul + position embeddings ----
    onehot = (jax.lax.broadcasted_iota(jnp.int32, (N, VP), 1)
              == ids_ref[...]).astype(jnp.float32)       # (N, VP)
    x = jnp.dot(onehot, wemb_ref[...],
                preferred_element_type=jnp.float32)      # (N, HP)
    pos = jnp.concatenate([vecs[0:S, :]] * GB, axis=0)   # (N, HP)
    x = x + pos

    # ---- embedding LayerNorm ----
    h = _layer_norm_padded(x, row(R_LN0G), row(R_LN0B))  # (N, HP)

    # ---- single-head self-attention: flat lane-dense MXU matmuls ----
    qkv = jnp.dot(h, wmat_ref[:, C_QKV:C_QKV + 3 * HP],
                  preferred_element_type=jnp.float32)    # (N, 3*HP)
    q = qkv[:, 0:HP] + row(R_BQ)
    k = qkv[:, HP:2 * HP] + row(R_BK)
    v = qkv[:, 2 * HP:3 * HP] + row(R_BV)

    scale = 1.0 / math.sqrt(H)
    scores = jax.lax.dot_general(                         # q @ k^T -> (N, N)
        q, k, (((1,), (1,)), ((), ())),
        preferred_element_type=jnp.float32) * scale + bias
    m = jnp.max(scores, axis=-1, keepdims=True)
    p = jnp.exp(scores - m)
    # NOTE: approximate EUP reciprocal (~1e-3 rel err) is a deliberate
    # deviation from the exact torch softmax; fine for cosine embeddings.
    p = p * pl.reciprocal(jnp.sum(p, axis=-1, keepdims=True), approx=True)
    ctx = jnp.dot(p, v, preferred_element_type=jnp.float32)   # (N, HP)

    attn = jnp.dot(ctx, wmat_ref[:, C_WO:C_WO + HP],
                   preferred_element_type=jnp.float32) + row(R_BO)
    h = _layer_norm_padded(h + attn, row(R_LN1G), row(R_LN1B))

    # ---- feed-forward ----
    # TODO(synk): HF BERT default activation is exact-erf GELU; the tanh
    # approximation is used here for guaranteed Mosaic lowering.
    ff = jnp.dot(h, wmat_ref[:, C_W1:C_W1 + IP],
                 preferred_element_type=jnp.float32) + row(R_B1)
    ff = jax.nn.gelu(ff, approximate=True)
    ff = jnp.dot(ff, wmat_ref[:, C_W2:C_W2 + HP],
                 preferred_element_type=jnp.float32) + row(R_B2)
    h = _layer_norm_padded(h + ff, row(R_LN2G), row(R_LN2B))

    # ---- pooler: tanh(W @ h[CLS] + b)  (the HF "[1]" pooled output) ----
    cls = h.reshape(GB, S, HP)[:, 0, :]                  # (GB, HP)
    pooled = jnp.tanh(jnp.dot(cls, wmat_ref[:, C_WP:C_WP + HP],
                              preferred_element_type=jnp.float32) + row(R_BP))

    # ---- F.normalize: L2 over last dim, eps = 1e-12 ----
    # Padded lanes (>= H) are exactly zero end-to-end, so the lane-dense
    # 128-wide store is equivalent to the logical H-wide embedding.
    ss = jnp.sum(pooled * pooled, axis=-1, keepdims=True)
    out_ref[...] = pooled * jax.lax.rsqrt(jnp.maximum(ss, EPS_NORM * EPS_NORM))


def _encode_impl(params, ids, mask):
    """ids / mask: (rows, S) int32 -> (rows, HP) lane-padded L2-normalized."""
    GB = ids.shape[0]
    N = GB * S
    ids_col = ids.reshape(N, 1)      # column form -> no in-kernel relayout
    mask_row = mask.reshape(1, N)    # key-mask row form
    return pl.pallas_call(
        encoder_kernel,
        out_shape=jax.ShapeDtypeStruct((GB, HP), jnp.float32),
        grid=(1,),                   # all groups folded into matmul rows
        in_specs=[
            pl.BlockSpec((N, 1), lambda i: (0, 0)),           # token ids
            pl.BlockSpec((1, N), lambda i: (0, 0)),           # attention mask
            pl.BlockSpec((VP, HP), lambda i: (0, 0)),         # word-emb (bf16)
            pl.BlockSpec((HP, 7 * HP), lambda i: (0, 0)),     # matrix slab (bf16)
            pl.BlockSpec((VEC_ROWS, HP), lambda i: (0, 0)),   # vector slab (f32)
        ],
        out_specs=pl.BlockSpec((GB, HP), lambda i: (0, 0)),
        compiler_params=pltpu.CompilerParams(
            dimension_semantics=("arbitrary",)),
    )(ids_col, mask_row, params['word_emb'], params['wmat'], params['vecs'])


@jax.jit
def _encode_single(params, ids, mask):
    return _encode_impl(params, ids.astype(jnp.int32), mask.astype(jnp.int32))


@jax.jit
def _encode_triplet(params, a_ids, a_mask, p_ids, p_mask, n_ids, n_mask):
    ids = jnp.concatenate([a_ids, p_ids, n_ids], axis=0).astype(jnp.int32)
    mask = jnp.concatenate([a_mask, p_mask, n_mask], axis=0).astype(jnp.int32)
    emb = _encode_impl(params, ids, mask)                 # (3B, HP)
    nb = a_ids.shape[0]
    return emb[:nb], emb[nb:2 * nb], emb[2 * nb:]


def trim_hidden(e):
    """Optional consumer-side helper: drop zero-padded lanes (columns >= H)."""
    return e[..., :H]


def get_embed(params, text_encoded):
    """normalize(embedder(**text_encoded)[1]) -- pooled, L2-normalized.

    Returns a lane-padded (batch, 128) array; columns >= H are exactly zero.
    """
    return _encode_single(params, text_encoded['input_ids'],
                          text_encoded['attention_mask'])


def forward(params, anchors, positives=None, negatives=None):
    if positives is None:
        return get_embed(params, anchors)
    # Fused path: anchors / positives / negatives share one pallas_call and
    # one grid step (group axis folded into the matmul row dimension).
    return _encode_triplet(
        params,
        anchors['input_ids'], anchors['attention_mask'],
        positives['input_ids'], positives['attention_mask'],
        negatives['input_ids'], negatives['attention_mask'])


def _pad(a, shape):
    out = jnp.zeros(shape, jnp.float32)
    return out.at[tuple(slice(0, s) for s in a.shape)].set(a)


def init_params(key):
    ks = jax.random.split(key, 9)
    w = lambda k, shape, scale=0.05: (
        scale * jax.random.normal(k, shape)).astype(jnp.float32)

    word = _pad(w(ks[0], (VOCAB, H)), (VP, HP))
    pos = w(ks[1], (S, H))

    wmat = jnp.concatenate([
        _pad(w(ks[2], (H, H)), (HP, HP)),     # wq
        _pad(w(ks[3], (H, H)), (HP, HP)),     # wk
        _pad(w(ks[4], (H, H)), (HP, HP)),     # wv
        _pad(w(ks[5], (H, H)), (HP, HP)),     # wo
        _pad(w(ks[6], (H, I)), (HP, IP)),     # w1
        _pad(w(ks[7], (I, H)), (IP, HP)),     # w2
        _pad(w(ks[8], (H, H)), (HP, HP)),     # wp (pooler)
    ], axis=1)                                # (HP, 7*HP)

    ln_gamma = _pad(jnp.ones((1, H), jnp.float32), (1, HP))[0]
    vecs = jnp.zeros((VEC_ROWS, HP), jnp.float32)
    vecs = vecs.at[0:S, :].set(_pad(pos, (S, HP)))
    for r in (R_LN0G, R_LN1G, R_LN2G):
        vecs = vecs.at[r, :].set(ln_gamma)
    # LayerNorm betas and all linear biases stay zero rows (BERT-like init).
    # Constant block-diagonal attention bias: 0 within a (group,batch)
    # sequence of S tokens, -1e9 across sequences (columns >= GB_MAX*S are
    # never read; they get -1e9 too).
    rseq = jnp.arange(GB_MAX * S)[:, None] // S
    cseq = jnp.arange(HP)[None, :] // S
    blk = jnp.where(rseq == cseq, 0.0, NEG_BIG).astype(jnp.float32)
    vecs = vecs.at[R_BLK:R_BLK + GB_MAX * S, :].set(blk)

    # bf16 weight slabs halve weight DMA bytes; accumulation stays float32.
    return {'word_emb': word.astype(jnp.bfloat16),
            'wmat': wmat.astype(jnp.bfloat16),
            'vecs': vecs}


if __name__ == "__main__":
    key = jax.random.PRNGKey(0)
    pkey, k1, k2, k3 = jax.random.split(key, 4)
    params = init_params(pkey)

    def make_batch(k):
        ids = jax.random.randint(k, (B, S), 0, VOCAB, dtype=jnp.int32)
        mask = jnp.ones((B, S), jnp.int32).at[:, S - 2:].set(0)  # pad 2 tokens
        return {'input_ids': ids, 'attention_mask': mask}

    anchors = make_batch(k1)
    positives = make_batch(k2)
    negatives = make_batch(k3)

    a, p, n = forward(params, anchors, positives, negatives)
    jax.block_until_ready((a, p, n))
    assert a.shape == (B, HP) and p.shape == (B, HP) and n.shape == (B, HP)
    for e in (a, p, n):
        # unit L2 norm (padded lanes are exactly zero -> full-lane norm == H-lane norm)
        assert bool(jnp.all(jnp.abs(jnp.sum(e * e, axis=-1) - 1.0) < 1e-4))
        assert bool(jnp.max(jnp.abs(e[:, H:])) < 1e-6)
    assert trim_hidden(a).shape == (B, H)

    a_only = forward(params, anchors)     # anchors-only path (B*S folded rows)
    jax.block_until_ready(a_only)
    assert a_only.shape == (B, HP)
    print("KERNEL_OK")
</pallas_src>

<mosaic_0001>
module attributes {stable_mosaic.version = 11 : i64} {
  func.func @encoder_kernel(%arg0: i32, %arg1: memref<48x1xi32, #tpu.memory_space<vmem>>, %arg2: memref<1x48xi32, #tpu.memory_space<vmem>>, %arg3: memref<128x128xbf16, #tpu.memory_space<vmem>>, %arg4: memref<128x896xbf16, #tpu.memory_space<vmem>>, %arg5: memref<72x128xf32, #tpu.memory_space<vmem>>, %arg6: memref<6x128xf32, #tpu.memory_space<vmem>>) attributes {dimension_semantics = [#tpu.dimension_semantics<arbitrary>], iteration_bounds = array<i64: 1>, scalar_prefetch = 0 : i64, scratch_operands = 0 : i64, tpu.core_type = #tpu.core_type<tc>, window_params = [{pipeline_mode = #tpu.pipeline_mode<synchronous>, transform_indices = @transform_0, window_bounds = array<i64: 48, 1>}, {pipeline_mode = #tpu.pipeline_mode<synchronous>, transform_indices = @transform_1, window_bounds = array<i64: 1, 48>}, {pipeline_mode = #tpu.pipeline_mode<synchronous>, transform_indices = @transform_2, window_bounds = array<i64: 128, 128>}, {pipeline_mode = #tpu.pipeline_mode<synchronous>, transform_indices = @transform_3, window_bounds = array<i64: 128, 896>}, {pipeline_mode = #tpu.pipeline_mode<synchronous>, transform_indices = @transform_4, window_bounds = array<i64: 72, 128>}, {pipeline_mode = #tpu.pipeline_mode<synchronous>, transform_indices = @transform_5, window_bounds = array<i64: 6, 128>}]} {
    %c0 = arith.constant 0 : index
    %c0_0 = arith.constant 0 : index
    %0 = vector.load %arg5[%c0, %c0_0] : memref<72x128xf32, #tpu.memory_space<vmem>>, vector<72x128xf32>
    %1 = vector.extract_strided_slice %0 {offsets = [24, 0], sizes = [48, 48], strides = [1, 1]} : vector<72x128xf32> to vector<48x48xf32>
    %c0_1 = arith.constant 0 : index
    %c0_2 = arith.constant 0 : index
    %2 = vector.load %arg2[%c0_1, %c0_2] : memref<1x48xi32, #tpu.memory_space<vmem>>, vector<1x48xi32>
    %c0_i32 = arith.constant 0 : i32
    %3 = vector.broadcast %c0_i32 : i32 to vector<1x48xi32>
    %4 = arith.cmpi sgt, %2, %3 : vector<1x48xi32>
    %cst = arith.constant 0.000000e+00 : f32
    %cst_3 = arith.constant -1.000000e+09 : f32
    %5 = vector.broadcast %cst : f32 to vector<1x48xf32>
    %6 = vector.broadcast %cst_3 : f32 to vector<1x48xf32>
    %7 = arith.select %4, %5, %6 : vector<1x48xi1>, vector<1x48xf32>
    %8 = vector.broadcast %7 : vector<1x48xf32> to vector<48x48xf32>
    %9 = arith.addf %1, %8 : vector<48x48xf32>
    %10 = tpu.iota {dimensions = array<i32: 1>} : vector<48x128xi32>
    %c0_4 = arith.constant 0 : index
    %c0_5 = arith.constant 0 : index
    %11 = vector.load %arg1[%c0_4, %c0_5] : memref<48x1xi32, #tpu.memory_space<vmem>>, vector<48x1xi32>
    %12 = vector.broadcast %11 : vector<48x1xi32> to vector<48x128xi32>
    %13 = arith.cmpi eq, %10, %12 : vector<48x128xi32>
    %14 = arith.extui %13 : vector<48x128xi1> to vector<48x128xi32>
    %15 = arith.sitofp %14 : vector<48x128xi32> to vector<48x128xf32>
    %c0_6 = arith.constant 0 : index
    %c0_7 = arith.constant 0 : index
    %16 = vector.load %arg3[%c0_6, %c0_7] : memref<128x128xbf16, #tpu.memory_space<vmem>>, vector<128x128xbf16>
    %cst_8 = arith.constant dense<0.000000e+00> : vector<48x128xf32>
    %17 = tpu.matmul %15, %16, %cst_8 {dimension_numbers = #tpu.dot_dimension_numbers<[1], [0], [0], [1], [0, 0, 1, 1], [], []>} : vector<48x128xf32>, vector<128x128xbf16>, vector<48x128xf32> -> vector<48x128xf32>
    %18 = vector.extract_strided_slice %0 {offsets = [0, 0], sizes = [8, 128], strides = [1, 1]} : vector<72x128xf32> to vector<8x128xf32>
    %19 = tpu.concatenate %18, %18, %18, %18, %18, %18 in 0 : vector<8x128xf32>, vector<8x128xf32>, vector<8x128xf32>, vector<8x128xf32>, vector<8x128xf32>, vector<8x128xf32> -> vector<48x128xf32>
    %20 = arith.addf %17, %19 : vector<48x128xf32>
    %21 = vector.extract_strided_slice %0 {offsets = [8, 0], sizes = [1, 128], strides = [1, 1]} : vector<72x128xf32> to vector<1x128xf32>
    %22 = vector.extract_strided_slice %0 {offsets = [9, 0], sizes = [1, 128], strides = [1, 1]} : vector<72x128xf32> to vector<1x128xf32>
    %cst_9 = arith.constant dense<0.000000e+00> : vector<48xf32>
    %23 = vector.multi_reduction <add>, %20, %cst_9 [1] : vector<48x128xf32> to vector<48xf32>
    %24 = vector.shape_cast %23 : vector<48xf32> to vector<48x1xf32>
    %25 = arith.mulf %20, %20 : vector<48x128xf32>
    %cst_10 = arith.constant dense<0.000000e+00> : vector<48xf32>
    %26 = vector.multi_reduction <add>, %25, %cst_10 [1] : vector<48x128xf32> to vector<48xf32>
    %27 = vector.shape_cast %26 : vector<48xf32> to vector<48x1xf32>
    %cst_11 = arith.constant 3.125000e-02 : f32
    %28 = vector.broadcast %cst_11 : f32 to vector<48x1xf32>
    %29 = arith.mulf %24, %28 : vector<48x1xf32>
    %cst_12 = arith.constant 3.125000e-02 : f32
    %30 = vector.broadcast %cst_12 : f32 to vector<48x1xf32>
    %31 = arith.mulf %27, %30 : vector<48x1xf32>
    %32 = arith.mulf %29, %29 : vector<48x1xf32>
    %33 = arith.subf %31, %32 : vector<48x1xf32>
    %cst_13 = arith.constant 0.000000e+00 : f32
    %34 = vector.broadcast %cst_13 : f32 to vector<48x1xf32>
    %35 = arith.maximumf %33, %34 : vector<48x1xf32>
    %36 = vector.broadcast %29 : vector<48x1xf32> to vector<48x128xf32>
    %37 = arith.subf %20, %36 : vector<48x128xf32>
    %cst_14 = arith.constant 9.99999996E-13 : f32
    %38 = vector.broadcast %cst_14 : f32 to vector<48x1xf32>
    %39 = arith.addf %35, %38 : vector<48x1xf32>
    %40 = math.rsqrt %39 : vector<48x1xf32>
    %41 = vector.broadcast %40 : vector<48x1xf32> to vector<48x128xf32>
    %42 = arith.mulf %37, %41 : vector<48x128xf32>
    %43 = vector.broadcast %21 : vector<1x128xf32> to vector<48x128xf32>
    %44 = arith.mulf %42, %43 : vector<48x128xf32>
    %45 = vector.broadcast %22 : vector<1x128xf32> to vector<48x128xf32>
    %46 = arith.addf %44, %45 : vector<48x128xf32>
    %c0_15 = arith.constant 0 : index
    %c0_16 = arith.constant 0 : index
    %47 = vector.load %arg4[%c0_15, %c0_16] : memref<128x896xbf16, #tpu.memory_space<vmem>>, vector<128x384xbf16>
    %cst_17 = arith.constant dense<0.000000e+00> : vector<48x384xf32>
    %48 = tpu.matmul %46, %47, %cst_17 {dimension_numbers = #tpu.dot_dimension_numbers<[1], [0], [0], [1], [0, 0, 1, 1], [], []>} : vector<48x128xf32>, vector<128x384xbf16>, vector<48x384xf32> -> vector<48x384xf32>
    %49 = vector.extract_strided_slice %48 {offsets = [0, 0], sizes = [48, 128], strides = [1, 1]} : vector<48x384xf32> to vector<48x128xf32>
    %50 = vector.extract_strided_slice %0 {offsets = [10, 0], sizes = [1, 128], strides = [1, 1]} : vector<72x128xf32> to vector<1x128xf32>
    %51 = vector.broadcast %50 : vector<1x128xf32> to vector<48x128xf32>
    %52 = arith.addf %49, %51 : vector<48x128xf32>
    %53 = vector.extract_strided_slice %48 {offsets = [0, 128], sizes = [48, 128], strides = [1, 1]} : vector<48x384xf32> to vector<48x128xf32>
    %54 = vector.extract_strided_slice %0 {offsets = [11, 0], sizes = [1, 128], strides = [1, 1]} : vector<72x128xf32> to vector<1x128xf32>
    %55 = vector.broadcast %54 : vector<1x128xf32> to vector<48x128xf32>
    %56 = arith.addf %53, %55 : vector<48x128xf32>
    %57 = vector.extract_strided_slice %48 {offsets = [0, 256], sizes = [48, 128], strides = [1, 1]} : vector<48x384xf32> to vector<48x128xf32>
    %58 = vector.extract_strided_slice %0 {offsets = [12, 0], sizes = [1, 128], strides = [1, 1]} : vector<72x128xf32> to vector<1x128xf32>
    %59 = vector.broadcast %58 : vector<1x128xf32> to vector<48x128xf32>
    %60 = arith.addf %57, %59 : vector<48x128xf32>
    %cst_18 = arith.constant dense<0.000000e+00> : vector<48x48xf32>
    %61 = tpu.matmul %52, %56, %cst_18 {dimension_numbers = #tpu.dot_dimension_numbers<[1], [1], [0], [0], [0, 0, 1, 0], [], []>} : vector<48x128xf32>, vector<48x128xf32>, vector<48x48xf32> -> vector<48x48xf32>
    %cst_19 = arith.constant 0.176776692 : f32
    %62 = vector.broadcast %cst_19 : f32 to vector<48x48xf32>
    %63 = arith.mulf %61, %62 : vector<48x48xf32>
    %64 = arith.addf %63, %9 : vector<48x48xf32>
    %cst_20 = arith.constant dense<0xFF800000> : vector<48xf32>
    %65 = vector.multi_reduction <maximumf>, %64, %cst_20 [1] : vector<48x48xf32> to vector<48xf32>
    %66 = vector.shape_cast %65 : vector<48xf32> to vector<48x1xf32>
    %67 = vector.broadcast %66 : vector<48x1xf32> to vector<48x48xf32>
    %68 = arith.subf %64, %67 : vector<48x48xf32>
    %69 = math.exp %68 : vector<48x48xf32>
    %cst_21 = arith.constant dense<0.000000e+00> : vector<48xf32>
    %70 = vector.multi_reduction <add>, %69, %cst_21 [1] : vector<48x48xf32> to vector<48xf32>
    %71 = vector.shape_cast %70 : vector<48xf32> to vector<48x1xf32>
    %72 = tpu.reciprocal %71 {approx = true} : vector<48x1xf32> -> vector<48x1xf32>
    %73 = vector.broadcast %72 : vector<48x1xf32> to vector<48x48xf32>
    %74 = arith.mulf %69, %73 : vector<48x48xf32>
    %cst_22 = arith.constant dense<0.000000e+00> : vector<48x128xf32>
    %75 = tpu.matmul %74, %60, %cst_22 {dimension_numbers = #tpu.dot_dimension_numbers<[1], [0], [0], [1], [0, 0, 1, 1], [], []>} : vector<48x48xf32>, vector<48x128xf32>, vector<48x128xf32> -> vector<48x128xf32>
    %c0_23 = arith.constant 0 : index
    %c384 = arith.constant 384 : index
    %76 = vector.load %arg4[%c0_23, %c384] : memref<128x896xbf16, #tpu.memory_space<vmem>>, vector<128x128xbf16>
    %cst_24 = arith.constant dense<0.000000e+00> : vector<48x128xf32>
    %77 = tpu.matmul %75, %76, %cst_24 {dimension_numbers = #tpu.dot_dimension_numbers<[1], [0], [0], [1], [0, 0, 1, 1], [], []>} : vector<48x128xf32>, vector<128x128xbf16>, vector<48x128xf32> -> vector<48x128xf32>
    %78 = vector.extract_strided_slice %0 {offsets = [13, 0], sizes = [1, 128], strides = [1, 1]} : vector<72x128xf32> to vector<1x128xf32>
    %79 = vector.broadcast %78 : vector<1x128xf32> to vector<48x128xf32>
    %80 = arith.addf %77, %79 : vector<48x128xf32>
    %81 = arith.addf %46, %80 : vector<48x128xf32>
    %82 = vector.extract_strided_slice %0 {offsets = [14, 0], sizes = [1, 128], strides = [1, 1]} : vector<72x128xf32> to vector<1x128xf32>
    %83 = vector.extract_strided_slice %0 {offsets = [15, 0], sizes = [1, 128], strides = [1, 1]} : vector<72x128xf32> to vector<1x128xf32>
    %cst_25 = arith.constant dense<0.000000e+00> : vector<48xf32>
    %84 = vector.multi_reduction <add>, %81, %cst_25 [1] : vector<48x128xf32> to vector<48xf32>
    %85 = vector.shape_cast %84 : vector<48xf32> to vector<48x1xf32>
    %86 = arith.mulf %81, %81 : vector<48x128xf32>
    %cst_26 = arith.constant dense<0.000000e+00> : vector<48xf32>
    %87 = vector.multi_reduction <add>, %86, %cst_26 [1] : vector<48x128xf32> to vector<48xf32>
    %88 = vector.shape_cast %87 : vector<48xf32> to vector<48x1xf32>
    %cst_27 = arith.constant 3.125000e-02 : f32
    %89 = vector.broadcast %cst_27 : f32 to vector<48x1xf32>
    %90 = arith.mulf %85, %89 : vector<48x1xf32>
    %cst_28 = arith.constant 3.125000e-02 : f32
    %91 = vector.broadcast %cst_28 : f32 to vector<48x1xf32>
    %92 = arith.mulf %88, %91 : vector<48x1xf32>
    %93 = arith.mulf %90, %90 : vector<48x1xf32>
    %94 = arith.subf %92, %93 : vector<48x1xf32>
    %cst_29 = arith.constant 0.000000e+00 : f32
    %95 = vector.broadcast %cst_29 : f32 to vector<48x1xf32>
    %96 = arith.maximumf %94, %95 : vector<48x1xf32>
    %97 = vector.broadcast %90 : vector<48x1xf32> to vector<48x128xf32>
    %98 = arith.subf %81, %97 : vector<48x128xf32>
    %cst_30 = arith.constant 9.99999996E-13 : f32
    %99 = vector.broadcast %cst_30 : f32 to vector<48x1xf32>
    %100 = arith.addf %96, %99 : vector<48x1xf32>
    %101 = math.rsqrt %100 : vector<48x1xf32>
    %102 = vector.broadcast %101 : vector<48x1xf32> to vector<48x128xf32>
    %103 = arith.mulf %98, %102 : vector<48x128xf32>
    %104 = vector.broadcast %82 : vector<1x128xf32> to vector<48x128xf32>
    %105 = arith.mulf %103, %104 : vector<48x128xf32>
    %106 = vector.broadcast %83 : vector<1x128xf32> to vector<48x128xf32>
    %107 = arith.addf %105, %106 : vector<48x128xf32>
    %c0_31 = arith.constant 0 : index
    %c512 = arith.constant 512 : index
    %108 = vector.load %arg4[%c0_31, %c512] : memref<128x896xbf16, #tpu.memory_space<vmem>>, vector<128x128xbf16>
    %cst_32 = arith.constant dense<0.000000e+00> : vector<48x128xf32>
    %109 = tpu.matmul %107, %108, %cst_32 {dimension_numbers = #tpu.dot_dimension_numbers<[1], [0], [0], [1], [0, 0, 1, 1], [], []>} : vector<48x128xf32>, vector<128x128xbf16>, vector<48x128xf32> -> vector<48x128xf32>
    %110 = vector.extract_strided_slice %0 {offsets = [16, 0], sizes = [1, 128], strides = [1, 1]} : vector<72x128xf32> to vector<1x128xf32>
    %111 = vector.broadcast %110 : vector<1x128xf32> to vector<48x128xf32>
    %112 = arith.addf %109, %111 : vector<48x128xf32>
    %113 = arith.mulf %112, %112 : vector<48x128xf32>
    %114 = arith.mulf %112, %113 : vector<48x128xf32>
    %cst_33 = arith.constant 4.471500e-02 : f32
    %115 = vector.broadcast %cst_33 : f32 to vector<48x128xf32>
    %116 = arith.mulf %115, %114 : vector<48x128xf32>
    %117 = arith.addf %112, %116 : vector<48x128xf32>
    %cst_34 = arith.constant 0.797884583 : f32
    %118 = vector.broadcast %cst_34 : f32 to vector<48x128xf32>
    %119 = arith.mulf %118, %117 : vector<48x128xf32>
    %120 = math.tanh %119 : vector<48x128xf32>
    %cst_35 = arith.constant 1.000000e+00 : f32
    %121 = vector.broadcast %cst_35 : f32 to vector<48x128xf32>
    %122 = arith.addf %121, %120 : vector<48x128xf32>
    %cst_36 = arith.constant 5.000000e-01 : f32
    %123 = vector.broadcast %cst_36 : f32 to vector<48x128xf32>
    %124 = arith.mulf %123, %122 : vector<48x128xf32>
    %125 = arith.mulf %112, %124 : vector<48x128xf32>
    %c0_37 = arith.constant 0 : index
    %c640 = arith.constant 640 : index
    %126 = vector.load %arg4[%c0_37, %c640] : memref<128x896xbf16, #tpu.memory_space<vmem>>, vector<128x128xbf16>
    %cst_38 = arith.constant dense<0.000000e+00> : vector<48x128xf32>
    %127 = tpu.matmul %125, %126, %cst_38 {dimension_numbers = #tpu.dot_dimension_numbers<[1], [0], [0], [1], [0, 0, 1, 1], [], []>} : vector<48x128xf32>, vector<128x128xbf16>, vector<48x128xf32> -> vector<48x128xf32>
    %128 = vector.extract_strided_slice %0 {offsets = [17, 0], sizes = [1, 128], strides = [1, 1]} : vector<72x128xf32> to vector<1x128xf32>
    %129 = vector.broadcast %128 : vector<1x128xf32> to vector<48x128xf32>
    %130 = arith.addf %127, %129 : vector<48x128xf32>
    %131 = arith.addf %107, %130 : vector<48x128xf32>
    %132 = vector.extract_strided_slice %0 {offsets = [18, 0], sizes = [1, 128], strides = [1, 1]} : vector<72x128xf32> to vector<1x128xf32>
    %133 = vector.extract_strided_slice %0 {offsets = [19, 0], sizes = [1, 128], strides = [1, 1]} : vector<72x128xf32> to vector<1x128xf32>
    %cst_39 = arith.constant dense<0.000000e+00> : vector<48xf32>
    %134 = vector.multi_reduction <add>, %131, %cst_39 [1] : vector<48x128xf32> to vector<48xf32>
    %135 = vector.shape_cast %134 : vector<48xf32> to vector<48x1xf32>
    %136 = arith.mulf %131, %131 : vector<48x128xf32>
    %cst_40 = arith.constant dense<0.000000e+00> : vector<48xf32>
    %137 = vector.multi_reduction <add>, %136, %cst_40 [1] : vector<48x128xf32> to vector<48xf32>
    %138 = vector.shape_cast %137 : vector<48xf32> to vector<48x1xf32>
    %cst_41 = arith.constant 3.125000e-02 : f32
    %139 = vector.broadcast %cst_41 : f32 to vector<48x1xf32>
    %140 = arith.mulf %135, %139 : vector<48x1xf32>
    %cst_42 = arith.constant 3.125000e-02 : f32
    %141 = vector.broadcast %cst_42 : f32 to vector<48x1xf32>
    %142 = arith.mulf %138, %141 : vector<48x1xf32>
    %143 = arith.mulf %140, %140 : vector<48x1xf32>
    %144 = arith.subf %142, %143 : vector<48x1xf32>
    %cst_43 = arith.constant 0.000000e+00 : f32
    %145 = vector.broadcast %cst_43 : f32 to vector<48x1xf32>
    %146 = arith.maximumf %144, %145 : vector<48x1xf32>
    %147 = vector.broadcast %140 : vector<48x1xf32> to vector<48x128xf32>
    %148 = arith.subf %131, %147 : vector<48x128xf32>
    %cst_44 = arith.constant 9.99999996E-13 : f32
    %149 = vector.broadcast %cst_44 : f32 to vector<48x1xf32>
    %150 = arith.addf %146, %149 : vector<48x1xf32>
    %151 = math.rsqrt %150 : vector<48x1xf32>
    %152 = vector.broadcast %151 : vector<48x1xf32> to vector<48x128xf32>
    %153 = arith.mulf %148, %152 : vector<48x128xf32>
    %154 = vector.broadcast %132 : vector<1x128xf32> to vector<48x128xf32>
    %155 = arith.mulf %153, %154 : vector<48x128xf32>
    %156 = vector.broadcast %133 : vector<1x128xf32> to vector<48x128xf32>
    %157 = arith.addf %155, %156 : vector<48x128xf32>
    %158 = vector.shape_cast %157 : vector<48x128xf32> to vector<6x8x128xf32>
    %159 = vector.extract_strided_slice %158 {offsets = [0, 0, 0], sizes = [6, 1, 128], strides = [1, 1, 1]} : vector<6x8x128xf32> to vector<6x1x128xf32>
    %160 = vector.shape_cast %159 : vector<6x1x128xf32> to vector<6x128xf32>
    %c0_45 = arith.constant 0 : index
    %c768 = arith.constant 768 : index
    %161 = vector.load %arg4[%c0_45, %c768] : memref<128x896xbf16, #tpu.memory_space<vmem>>, vector<128x128xbf16>
    %cst_46 = arith.constant dense<0.000000e+00> : vector<6x128xf32>
    %162 = tpu.matmul %160, %161, %cst_46 {dimension_numbers = #tpu.dot_dimension_numbers<[1], [0], [0], [1], [0, 0, 1, 1], [], []>} : vector<6x128xf32>, vector<128x128xbf16>, vector<6x128xf32> -> vector<6x128xf32>
    %163 = vector.extract_strided_slice %0 {offsets = [20, 0], sizes = [1, 128], strides = [1, 1]} : vector<72x128xf32> to vector<1x128xf32>
    %164 = vector.broadcast %163 : vector<1x128xf32> to vector<6x128xf32>
    %165 = arith.addf %162, %164 : vector<6x128xf32>
    %166 = math.tanh %165 : vector<6x128xf32>
    %167 = arith.mulf %166, %166 : vector<6x128xf32>
    %cst_47 = arith.constant dense<0.000000e+00> : vector<6xf32>
    %168 = vector.multi_reduction <add>, %167, %cst_47 [1] : vector<6x128xf32> to vector<6xf32>
    %169 = vector.shape_cast %168 : vector<6xf32> to vector<6x1xf32>
    %cst_48 = arith.constant 1.000000e-24 : f32
    %170 = vector.broadcast %cst_48 : f32 to vector<6x1xf32>
    %171 = arith.maximumf %169, %170 : vector<6x1xf32>
    %172 = math.rsqrt %171 : vector<6x1xf32>
    %173 = vector.broadcast %172 : vector<6x1xf32> to vector<6x128xf32>
    %174 = arith.mulf %166, %173 : vector<6x128xf32>
    %c0_49 = arith.constant 0 : index
    %c0_50 = arith.constant 0 : index
    %175 = vector.load %arg6[%c0_49, %c0_50] : memref<6x128xf32, #tpu.memory_space<vmem>>, vector<6x128xf32>
    tpu.vector_store %arg6[%c0_49, %c0_50], %174 {strides = array<i32>} : memref<6x128xf32, #tpu.memory_space<vmem>>, vector<6x128xf32>,
    return
  }
  func.func @transform_0(%arg0: i32) -> (i32, i32) {
    %c0_i32 = arith.constant 0 : i32
    %c0_i32_0 = arith.constant 0 : i32
    %c0_i32_1 = arith.constant 0 : i32
    return %c0_i32, %c0_i32_0 : i32, i32
  }
  func.func @transform_1(%arg0: i32) -> (i32, i32) {
    %c0_i32 = arith.constant 0 : i32
    %c0_i32_0 = arith.constant 0 : i32
    %c0_i32_1 = arith.constant 0 : i32
    return %c0_i32, %c0_i32_0 : i32, i32
  }
  func.func @transform_2(%arg0: i32) -> (i32, i32) {
    %c0_i32 = arith.constant 0 : i32
    %c0_i32_0 = arith.constant 0 : i32
    %c0_i32_1 = arith.constant 0 : i32
    return %c0_i32, %c0_i32_0 : i32, i32
  }
  func.func @transform_3(%arg0: i32) -> (i32, i32) {
    %c0_i32 = arith.constant 0 : i32
    %c0_i32_0 = arith.constant 0 : i32
    %c0_i32_1 = arith.constant 0 : i32
    return %c0_i32, %c0_i32_0 : i32, i32
  }
  func.func @transform_4(%arg0: i32) -> (i32, i32) {
    %c0_i32 = arith.constant 0 : i32
    %c0_i32_0 = arith.constant 0 : i32
    %c0_i32_1 = arith.constant 0 : i32
    return %c0_i32, %c0_i32_0 : i32, i32
  }
  func.func @transform_5(%arg0: i32) -> (i32, i32) {
    %c0_i32 = arith.constant 0 : i32
    %c0_i32_0 = arith.constant 0 : i32
    %c0_i32_1 = arith.constant 0 : i32
    return %c0_i32, %c0_i32_0 : i32, i32
  }
}

</mosaic_0001>

<llo_original>
// kernel: _encode_triplet.1
$region0: #{_encode_triplet.1}
  #allocation0 [shape = 'u32[]', space=smem, size = 0x4, offset = 0x4, fixed_abs, tag = 'smem constant byte address 0x4 - core index']
  #allocation1 [shape = 'u32[72,128]{1,0:T(1,128)}', space=vmem, size = 0x9000, scoped, tag = 'internal scratch']
  %s0 = inlined_call_operand.vmem [shape: s32[48,1], index: 0, kind: input, shape index: {}]
  %s1 = inlined_call_operand.vmem [shape: s32[1,48], index: 1, kind: input, shape index: {}]
  %s2 = inlined_call_operand.hbm [shape: bf16[128,128], index: 2, kind: input, shape index: {}]
  %s3 = inlined_call_operand.hbm [shape: bf16[128,896], index: 3, kind: input, shape index: {}]
  %s4 = inlined_call_operand.vmem [shape: f32[72,128], index: 4, kind: input, shape index: {}]
  %s5 = inlined_call_operand.vmem [shape: f32[6,128], index: 5, kind: output, shape index: {}]
  %s6 = sld [smem:[#allocation0]]
  $region38: #{_encode_triplet.1} parent=0
    _
  %s8 = ssub.s32 1, %s6
  %s9 = scalar_select 0, %s8, %s6
  $region1: #{_encode_triplet.1} parent=0
    #allocation2 [shape = 'u8[32768]{0}', space=vmem, size = 0x8000, scoped, tag = 'input window, operand 2, single buffered']
    #allocation3 [shape = 's32[1]{0}', space=sflag, size = 0x4, scoped, tag = 'scoped memory for _encode_triplet.1']
    #allocation4 [shape = 'u8[229376]{0}', space=vmem, size = 0x38000, scoped, tag = 'input window, operand 3, single buffered']
    #allocation5 [shape = 's32[1]{0}', space=sflag, size = 0x4, scoped, tag = 'scoped memory for _encode_triplet.1']
    %10 = vsyncpa [#allocation3], 0
    %11 = vsyncpa [#allocation5], 0
    // Predicated region
    $region2: #{_encode_triplet.1} parent=1 // pred_check
      _
    $region3: #{_encode_triplet.1} parent=1 // pred_check_branch
      %13 = sbr.rel (0) target = $region5
    $region4: #{_encode_triplet.1} parent=1 // pred_region
      _
    $region5: #{_encode_triplet.1} parent=1 // pred_fallthru
      _
    // Predicated region
    $region6: #{_encode_triplet.1} parent=1 // pred_check
      _
    $region7: #{_encode_triplet.1} parent=1 // pred_check_branch
      %15 = sbr.rel (0) target = $region9
    $region8: #{_encode_triplet.1} parent=1 // pred_region
      _
    $region9: #{_encode_triplet.1} parent=1 // pred_fallthru
      _
    // Predicated region
    $region10: #{_encode_triplet.1} parent=1 // pred_check
      _
    $region11: #{_encode_triplet.1} parent=1 // pred_check_branch
      %17 = sbr.rel (0) target = $region13
    $region12: #{_encode_triplet.1} parent=1 // pred_region
      %19 = vsyncadd [#allocation3], 0
      %s20 = sshll.u32 %s2, 4
      %s21 = int_to_ptr.hbm [resolvable:$true] %s20
      %s22 = sshll.u32 [#allocation2], 4
      %s23 = int_to_ptr.vmem [resolvable:$true] %s22
      %28 = dma.hbm_to_vmem [thread:$0]  %s21, 1024, %s23, [#allocation3], 64, 64, 4
    $region13: #{_encode_triplet.1} parent=1 // pred_fallthru
      _
    // Predicated region
    $region14: #{_encode_triplet.1} parent=1 // pred_check
      _
    $region15: #{_encode_triplet.1} parent=1 // pred_check_branch
      %30 = sbr.rel (0) target = $region17
    $region16: #{_encode_triplet.1} parent=1 // pred_region
      %32 = vsyncadd [#allocation5], 0
      %s33 = sshll.u32 %s3, 4
      %s34 = int_to_ptr.hbm [resolvable:$true] %s33
      %s35 = sshll.u32 [#allocation4], 4
      %s36 = int_to_ptr.vmem [resolvable:$true] %s35
      %41 = dma.hbm_to_vmem [thread:$0]  %s34, 7168, %s36, [#allocation5], 448, 448, 28
    $region17: #{_encode_triplet.1} parent=1 // pred_fallthru
      _
    // Predicated region
    $region18: #{_encode_triplet.1} parent=1 // pred_check
      _
    $region19: #{_encode_triplet.1} parent=1 // pred_check_branch
      %43 = sbr.rel (0) target = $region21
    $region20: #{_encode_triplet.1} parent=1 // pred_region
      _
    $region21: #{_encode_triplet.1} parent=1 // pred_fallthru
      _
    // Predicated region
    $region22: #{_encode_triplet.1} parent=1 // pred_check
      _
    $region23: #{_encode_triplet.1} parent=1 // pred_check_branch
      %45 = sbr.rel (0) target = $region25
    $region24: #{_encode_triplet.1} parent=1 // pred_region
      %47 = dma.done [#allocation3], 1024
    $region25: #{_encode_triplet.1} parent=1 // pred_fallthru
      _
    // Predicated region
    $region26: #{_encode_triplet.1} parent=1 // pred_check
      _
    $region27: #{_encode_triplet.1} parent=1 // pred_check_branch
      %49 = sbr.rel (0) target = $region29
    $region28: #{_encode_triplet.1} parent=1 // pred_region
      %51 = dma.done [#allocation5], 7168
    $region29: #{_encode_triplet.1} parent=1 // pred_fallthru
      _
    %v52 = vld [vmem:[%s4] sm:$0xff]
    %v53 = vld [vmem:[%s4 + $0x8] sm:$0xff]
    %v54 = vld [vmem:[%s4 + $0x10] sm:$0xff]
    %v55 = vld [vmem:[%s4 + $0x18] sm:$0xff]
    %v56 = vld [vmem:[%s4 + $0x20] sm:$0xff]
    %v57 = vld [vmem:[%s4 + $0x28] sm:$0xff]
    %v58 = vld [vmem:[%s4 + $0x30] sm:$0xff]
    %v59 = vld [vmem:[%s4 + $0x38] sm:$0xff]
    %v60 = vld [vmem:[%s4 + $0x40] sm:$0xff]
    %v61 = vld [vmem:[%s1] sm:$0x1]
    %vm62 = vcmp.gt.s32.totalorder %v61, 0
    %v63 = vsel %vm62, 0.0, -1e+09
    %v65 = vperm.slane %v63, 0
    %v67 = vadd.f32 %v55, %v65
    %v68 = vadd.f32 %v56, %v65
    %v69 = vadd.f32 %v57, %v65
    %v70 = vadd.f32 %v58, %v65
    %v71 = vadd.f32 %v59, %v65
    %v72 = vadd.f32 %v60, %v65
    %v73 = vlaneseq
    %v74 = vand.u32 %v73, 127
    %v75 = vld [vmem:[%s0] sm:$0xff]
    %v76 = vld [vmem:[%s0 + $0x8] sm:$0xff]
    %v77 = vld [vmem:[%s0 + $0x10] sm:$0xff]
    %v78 = vld [vmem:[%s0 + $0x18] sm:$0xff]
    %v79 = vld [vmem:[%s0 + $0x20] sm:$0xff]
    %v80 = vld [vmem:[%s0 + $0x28] sm:$0xff]
    %81 = vset.pattern.permute.xlu0 0
    %82 = vperm.xlu0 %81, %v75
    %v83 = vpop.permute.xlu0 %82
    %84 = vset.pattern.permute.xlu0 0
    %85 = vperm.xlu0 %84, %v76
    %v86 = vpop.permute.xlu0 %85
    %87 = vset.pattern.permute.xlu0 0
    %88 = vperm.xlu0 %87, %v77
    %v89 = vpop.permute.xlu0 %88
    %90 = vset.pattern.permute.xlu0 0
    %91 = vperm.xlu0 %90, %v78
    %v92 = vpop.permute.xlu0 %91
    %93 = vset.pattern.permute.xlu0 0
    %94 = vperm.xlu0 %93, %v79
    %v95 = vpop.permute.xlu0 %94
    %96 = vset.pattern.permute.xlu0 0
    %97 = vperm.xlu0 %96, %v80
    %v98 = vpop.permute.xlu0 %97
    %vm99 = vcmp.eq.s32.totalorder %v74, %v83
    %vm100 = vcmp.eq.s32.totalorder %v74, %v86
    %vm101 = vcmp.eq.s32.totalorder %v74, %v89
    %vm102 = vcmp.eq.s32.totalorder %v74, %v92
    %vm103 = vcmp.eq.s32.totalorder %v74, %v95
    %vm104 = vcmp.eq.s32.totalorder %v74, %v98
    %v105 = vsel %vm99, 1, 0
    %v106 = vsel %vm100, 1, 0
    %v107 = vsel %vm101, 1, 0
    %v108 = vsel %vm102, 1, 0
    %v109 = vsel %vm103, 1, 0
    %v110 = vsel %vm104, 1, 0
    %v111 = vcvt.s32.f32 %v105
    %v112 = vcvt.s32.f32 %v106
    %v113 = vcvt.s32.f32 %v107
    %v114 = vcvt.s32.f32 %v108
    %v115 = vcvt.s32.f32 %v109
    %v116 = vcvt.s32.f32 %v110
    %v117 = vld [vmem:[#allocation2] sm:$0xf]
    %v118 = vld [vmem:[#allocation2 + $0x4] sm:$0xf]
    %v119 = vld [vmem:[#allocation2 + $0x8] sm:$0xf]
    %v120 = vld [vmem:[#allocation2 + $0xc] sm:$0xf]
    %v121 = vld [vmem:[#allocation2 + $0x10] sm:$0xf]
    %v122 = vld [vmem:[#allocation2 + $0x14] sm:$0xf]
    %v123 = vld [vmem:[#allocation2 + $0x18] sm:$0xf]
    %v124 = vld [vmem:[#allocation2 + $0x1c] sm:$0xf]
    %v125 = vld [vmem:[#allocation2 + $0x20] sm:$0xf]
    %v126 = vld [vmem:[#allocation2 + $0x24] sm:$0xf]
    %v127 = vld [vmem:[#allocation2 + $0x28] sm:$0xf]
    %v128 = vld [vmem:[#allocation2 + $0x2c] sm:$0xf]
    %v129 = vld [vmem:[#allocation2 + $0x30] sm:$0xf]
    %v130 = vld [vmem:[#allocation2 + $0x34] sm:$0xf]
    %v131 = vld [vmem:[#allocation2 + $0x38] sm:$0xf]
    %v132 = vld [vmem:[#allocation2 + $0x3c] sm:$0xf]
    %v149 = vunpack.c.l.b16 %v117
    %v150 = vunpack.c.l.b16 %v118
    %v151 = vunpack.c.l.b16 %v119
    %v152 = vunpack.c.l.b16 %v120
    %v153 = vunpack.c.l.b16 %v121
    %v154 = vunpack.c.l.b16 %v122
    %v155 = vunpack.c.l.b16 %v123
    %v156 = vunpack.c.l.b16 %v124
    %v157 = vunpack.c.l.b16 %v125
    %v158 = vunpack.c.l.b16 %v126
    %v159 = vunpack.c.l.b16 %v127
    %v160 = vunpack.c.l.b16 %v128
    %v161 = vunpack.c.l.b16 %v129
    %v162 = vunpack.c.l.b16 %v130
    %v163 = vunpack.c.l.b16 %v131
    %v164 = vunpack.c.l.b16 %v132
    %v165 = vpack.c.b16 %v150, %v149
    %v166 = vpack.c.b16 %v152, %v151
    %v167 = vpack.c.b16 %v154, %v153
    %v168 = vpack.c.b16 %v156, %v155
    %v169 = vpack.c.b16 %v158, %v157
    %v170 = vpack.c.b16 %v160, %v159
    %v171 = vpack.c.b16 %v162, %v161
    %v172 = vpack.c.b16 %v164, %v163
    %181 = vmatpush.bf16.msra.mxu0 %v172
    %182 = vmatpush.bf16.msra.mxu0 %v171
    %183 = vmatpush.bf16.msra.mxu0 %v170
    %184 = vmatpush.bf16.msra.mxu0 %v169
    %185 = vmatpush.bf16.msra.mxu0 %v168
    %186 = vmatpush.bf16.msra.mxu0 %v167
    %187 = vmatpush.bf16.msra.mxu0 %v166
    %188 = vmatpush.bf16.msra.mxu0 %v165
    %189 = vmatmul.f32.gmra.mxu0 %v111
    %v190 = vpop.f32.mrf.mxu0
    %v191 = vadd.f32 %v52, %v190
    %192 = vmatmul.f32.gmra.mxu0 %v112
    %v193 = vpop.f32.mrf.mxu0
    %v194 = vadd.f32 %v52, %v193
    %195 = vmatmul.f32.gmra.mxu0 %v113
    %v196 = vpop.f32.mrf.mxu0
    %v197 = vadd.f32 %v52, %v196
    %198 = vmatmul.f32.gmra.mxu0 %v114
    %v199 = vpop.f32.mrf.mxu0
    %v200 = vadd.f32 %v52, %v199
    %201 = vmatmul.f32.gmra.mxu0 %v115
    %v202 = vpop.f32.mrf.mxu0
    %v203 = vadd.f32 %v52, %v202
    %204 = vmatmul.f32.gmra.mxu0 %v116
    %v205 = vpop.f32.mrf.mxu0
    %v206 = vadd.f32 %v52, %v205
    %207 = vdwg.mxu0
    %208 = vadd.xlane.f32.xlu0 %v191
    %v209 = vpop.xlane.xlu0 %208
    %210 = vadd.xlane.f32.xlu0 %v194
    %v211 = vpop.xlane.xlu0 %210
    %212 = vadd.xlane.f32.xlu0 %v197
    %v213 = vpop.xlane.xlu0 %212
    %214 = vadd.xlane.f32.xlu0 %v200
    %v215 = vpop.xlane.xlu0 %214
    %216 = vadd.xlane.f32.xlu0 %v203
    %v217 = vpop.xlane.xlu0 %216
    %218 = vadd.xlane.f32.xlu0 %v206
    %v219 = vpop.xlane.xlu0 %218
    %v220 = vmul.f32 %v191, %v191
    %v221 = vmul.f32 %v194, %v194
    %v222 = vmul.f32 %v197, %v197
    %v223 = vmul.f32 %v200, %v200
    %v224 = vmul.f32 %v203, %v203
    %v225 = vmul.f32 %v206, %v206
    %226 = vadd.xlane.f32.xlu0 %v220
    %v227 = vpop.xlane.xlu0 %226
    %228 = vadd.xlane.f32.xlu0 %v221
    %v229 = vpop.xlane.xlu0 %228
    %230 = vadd.xlane.f32.xlu0 %v222
    %v231 = vpop.xlane.xlu0 %230
    %232 = vadd.xlane.f32.xlu0 %v223
    %v233 = vpop.xlane.xlu0 %232
    %234 = vadd.xlane.f32.xlu0 %v224
    %v235 = vpop.xlane.xlu0 %234
    %236 = vadd.xlane.f32.xlu0 %v225
    %v237 = vpop.xlane.xlu0 %236
    %v238 = vmul.f32 %v209, 0.03125
    %v239 = vmul.f32 %v211, 0.03125
    %v240 = vmul.f32 %v213, 0.03125
    %v241 = vmul.f32 %v215, 0.03125
    %v242 = vmul.f32 %v217, 0.03125
    %v243 = vmul.f32 %v219, 0.03125
    %v244 = vmul.f32 %v227, 0.03125
    %v245 = vmul.f32 %v229, 0.03125
    %v246 = vmul.f32 %v231, 0.03125
    %v247 = vmul.f32 %v233, 0.03125
    %v248 = vmul.f32 %v235, 0.03125
    %v249 = vmul.f32 %v237, 0.03125
    %v250 = vmul.f32 %v238, %v238
    %v251 = vmul.f32 %v239, %v239
    %v252 = vmul.f32 %v240, %v240
    %v253 = vmul.f32 %v241, %v241
    %v254 = vmul.f32 %v242, %v242
    %v255 = vmul.f32 %v243, %v243
    %v256 = vsub.f32 %v244, %v250
    %v257 = vsub.f32 %v245, %v251
    %v258 = vsub.f32 %v246, %v252
    %v259 = vsub.f32 %v247, %v253
    %v260 = vsub.f32 %v248, %v254
    %v261 = vsub.f32 %v249, %v255
    %v262 = vmax.f32 %v256, 0.0
    %v263 = vmax.f32 %v257, 0.0
    %v264 = vmax.f32 %v258, 0.0
    %v265 = vmax.f32 %v259, 0.0
    %v266 = vmax.f32 %v260, 0.0
    %v267 = vmax.f32 %v261, 0.0
    %v268 = vsub.f32 %v191, %v238
    %v269 = vsub.f32 %v194, %v239
    %v270 = vsub.f32 %v197, %v240
    %v271 = vsub.f32 %v200, %v241
    %v272 = vsub.f32 %v203, %v242
    %v273 = vsub.f32 %v206, %v243
    %v274 = vadd.f32 %v262, 1e-12
    %v275 = vadd.f32 %v263, 1e-12
    %v276 = vadd.f32 %v264, 1e-12
    %v277 = vadd.f32 %v265, 1e-12
    %v278 = vadd.f32 %v266, 1e-12
    %v279 = vadd.f32 %v267, 1e-12
    %v280 = vrsqrt.pop %v274
    %v281 = vmul.f32 %v280, %v274
    %v282 = vmul.f32 %v281, %v280
    %v283 = vmul.f32 0.5, %v282
    %v284 = vsub.f32 1.5, %v283
    %v285 = vmul.f32 %v280, %v284
    %vm286 = vweird.f32 %v274
    %vm287 = vweird.f32 %v280
    %vm288 = vmor %vm286, %vm287
    %v289 = vsel %vm288, %v280, %v285
    %v290 = vrsqrt.pop %v275
    %v291 = vmul.f32 %v290, %v275
    %v292 = vmul.f32 %v291, %v290
    %v293 = vmul.f32 0.5, %v292
    %v294 = vsub.f32 1.5, %v293
    %v295 = vmul.f32 %v290, %v294
    %vm296 = vweird.f32 %v275
    %vm297 = vweird.f32 %v290
    %vm298 = vmor %vm296, %vm297
    %v299 = vsel %vm298, %v290, %v295
    %v300 = vrsqrt.pop %v276
    %v301 = vmul.f32 %v300, %v276
    %v302 = vmul.f32 %v301, %v300
    %v303 = vmul.f32 0.5, %v302
    %v304 = vsub.f32 1.5, %v303
    %v305 = vmul.f32 %v300, %v304
    %vm306 = vweird.f32 %v276
    %vm307 = vweird.f32 %v300
    %vm308 = vmor %vm306, %vm307
    %v309 = vsel %vm308, %v300, %v305
    %v310 = vrsqrt.pop %v277
    %v311 = vmul.f32 %v310, %v277
    %v312 = vmul.f32 %v311, %v310
    %v313 = vmul.f32 0.5, %v312
    %v314 = vsub.f32 1.5, %v313
    %v315 = vmul.f32 %v310, %v314
    %vm316 = vweird.f32 %v277
    %vm317 = vweird.f32 %v310
    %vm318 = vmor %vm316, %vm317
    %v319 = vsel %vm318, %v310, %v315
    %v320 = vrsqrt.pop %v278
    %v321 = vmul.f32 %v320, %v278
    %v322 = vmul.f32 %v321, %v320
    %v323 = vmul.f32 0.5, %v322
    %v324 = vsub.f32 1.5, %v323
    %v325 = vmul.f32 %v320, %v324
    %vm326 = vweird.f32 %v278
    %vm327 = vweird.f32 %v320
    %vm328 = vmor %vm326, %vm327
    %v329 = vsel %vm328, %v320, %v325
    %v330 = vrsqrt.pop %v279
    %v331 = vmul.f32 %v330, %v279
    %v332 = vmul.f32 %v331, %v330
    %v333 = vmul.f32 0.5, %v332
    %v334 = vsub.f32 1.5, %v333
    %v335 = vmul.f32 %v330, %v334
    %vm336 = vweird.f32 %v279
    %vm337 = vweird.f32 %v330
    %vm338 = vmor %vm336, %vm337
    %v339 = vsel %vm338, %v330, %v335
    %v340 = vmul.f32 %v268, %v289
    %v341 = vmul.f32 %v269, %v299
    %v342 = vmul.f32 %v270, %v309
    %v343 = vmul.f32 %v271, %v319
    %v344 = vmul.f32 %v272, %v329
    %v345 = vmul.f32 %v273, %v339
    %v346 = vperm.slane %v53, 0
    %v347 = vmul.f32 %v340, %v346
    %v348 = vmul.f32 %v341, %v346
    %v349 = vmul.f32 %v342, %v346
    %v350 = vmul.f32 %v343, %v346
    %v351 = vmul.f32 %v344, %v346
    %v352 = vmul.f32 %v345, %v346
    %v353 = vperm.slane %v53, 1
    %v354 = vadd.f32 %v347, %v353
    %v355 = vadd.f32 %v348, %v353
    %v356 = vadd.f32 %v349, %v353
    %v357 = vadd.f32 %v350, %v353
    %v358 = vadd.f32 %v351, %v353
    %v359 = vadd.f32 %v352, %v353
    %v360 = vld [vmem:[#allocation4] sm:$0xff]
    %v361 = vld [vmem:[#allocation4 + $0x8] sm:$0xf]
    %v362 = vld [vmem:[#allocation4 + $0x1c] sm:$0xff]
    %v363 = vld [vmem:[#allocation4 + $0x24] sm:$0xf]
    %v364 = vld [vmem:[#allocation4 + $0x38] sm:$0xff]
    %v365 = vld [vmem:[#allocation4 + $0x40] sm:$0xf]
    %v366 = vld [vmem:[#allocation4 + $0x54] sm:$0xff]
    %v367 = vld [vmem:[#allocation4 + $0x5c] sm:$0xf]
    %v368 = vld [vmem:[#allocation4 + $0x70] sm:$0xff]
    %v369 = vld [vmem:[#allocation4 + $0x78] sm:$0xf]
    %v370 = vld [vmem:[#allocation4 + $0x8c] sm:$0xff]
    %v371 = vld [vmem:[#allocation4 + $0x94] sm:$0xf]
    %v372 = vld [vmem:[#allocation4 + $0xa8] sm:$0xff]
    %v373 = vld [vmem:[#allocation4 + $0xb0] sm:$0xf]
    %v374 = vld [vmem:[#allocation4 + $0xc4] sm:$0xff]
    %v375 = vld [vmem:[#allocation4 + $0xcc] sm:$0xf]
    %v376 = vld [vmem:[#allocation4 + $0xe0] sm:$0xff]
    %v377 = vld [vmem:[#allocation4 + $0xe8] sm:$0xf]
    %v378 = vld [vmem:[#allocation4 + $0xfc] sm:$0xff]
    %v379 = vld [vmem:[#allocation4 + $0x104] sm:$0xf]
    %v380 = vld [vmem:[#allocation4 + $0x118] sm:$0xff]
    %v381 = vld [vmem:[#allocation4 + $0x120] sm:$0xf]
    %v382 = vld [vmem:[#allocation4 + $0x134] sm:$0xff]
    %v383 = vld [vmem:[#allocation4 + $0x13c] sm:$0xf]
    %v384 = vld [vmem:[#allocation4 + $0x150] sm:$0xff]
    %v385 = vld [vmem:[#allocation4 + $0x158] sm:$0xf]
    %v386 = vld [vmem:[#allocation4 + $0x16c] sm:$0xff]
    %v387 = vld [vmem:[#allocation4 + $0x174] sm:$0xf]
    %v388 = vld [vmem:[#allocation4 + $0x188] sm:$0xff]
    %v389 = vld [vmem:[#allocation4 + $0x190] sm:$0xf]
    %v390 = vld [vmem:[#allocation4 + $0x1a4] sm:$0xff]
    %v391 = vld [vmem:[#allocation4 + $0x1ac] sm:$0xf]
    %v424 = vunpack.c.l.b16 %v360
    %v425 = vunpack.c.h.b16 %v360
    %v426 = vunpack.c.l.b16 %v361
    %v427 = vunpack.c.l.b16 %v362
    %v428 = vunpack.c.h.b16 %v362
    %v429 = vunpack.c.l.b16 %v363
    %v430 = vunpack.c.l.b16 %v364
    %v431 = vunpack.c.h.b16 %v364
    %v432 = vunpack.c.l.b16 %v365
    %v433 = vunpack.c.l.b16 %v366
    %v434 = vunpack.c.h.b16 %v366
    %v435 = vunpack.c.l.b16 %v367
    %v436 = vunpack.c.l.b16 %v368
    %v437 = vunpack.c.h.b16 %v368
    %v438 = vunpack.c.l.b16 %v369
    %v439 = vunpack.c.l.b16 %v370
    %v440 = vunpack.c.h.b16 %v370
    %v441 = vunpack.c.l.b16 %v371
    %v442 = vunpack.c.l.b16 %v372
    %v443 = vunpack.c.h.b16 %v372
    %v444 = vunpack.c.l.b16 %v373
    %v445 = vunpack.c.l.b16 %v374
    %v446 = vunpack.c.h.b16 %v374
    %v447 = vunpack.c.l.b16 %v375
    %v448 = vunpack.c.l.b16 %v376
    %v449 = vunpack.c.h.b16 %v376
    %v450 = vunpack.c.l.b16 %v377
    %v451 = vunpack.c.l.b16 %v378
    %v452 = vunpack.c.h.b16 %v378
    %v453 = vunpack.c.l.b16 %v379
    %v454 = vunpack.c.l.b16 %v380
    %v455 = vunpack.c.h.b16 %v380
    %v456 = vunpack.c.l.b16 %v381
    %v457 = vunpack.c.l.b16 %v382
    %v458 = vunpack.c.h.b16 %v382
    %v459 = vunpack.c.l.b16 %v383
    %v460 = vunpack.c.l.b16 %v384
    %v461 = vunpack.c.h.b16 %v384
    %v462 = vunpack.c.l.b16 %v385
    %v463 = vunpack.c.l.b16 %v386
    %v464 = vunpack.c.h.b16 %v386
    %v465 = vunpack.c.l.b16 %v387
    %v466 = vunpack.c.l.b16 %v388
    %v467 = vunpack.c.h.b16 %v388
    %v468 = vunpack.c.l.b16 %v389
    %v469 = vunpack.c.l.b16 %v390
    %v470 = vunpack.c.h.b16 %v390
    %v471 = vunpack.c.l.b16 %v391
    %v472 = vpack.c.b16 %v427, %v424
    %v473 = vpack.c.b16 %v428, %v425
    %v474 = vpack.c.b16 %v429, %v426
    %v475 = vpack.c.b16 %v433, %v430
    %v476 = vpack.c.b16 %v434, %v431
    %v477 = vpack.c.b16 %v435, %v432
    %v478 = vpack.c.b16 %v439, %v436
    %v479 = vpack.c.b16 %v440, %v437
    %v480 = vpack.c.b16 %v441, %v438
    %v481 = vpack.c.b16 %v445, %v442
    %v482 = vpack.c.b16 %v446, %v443
    %v483 = vpack.c.b16 %v447, %v444
    %v484 = vpack.c.b16 %v451, %v448
    %v485 = vpack.c.b16 %v452, %v449
    %v486 = vpack.c.b16 %v453, %v450
    %v487 = vpack.c.b16 %v457, %v454
    %v488 = vpack.c.b16 %v458, %v455
    %v489 = vpack.c.b16 %v459, %v456
    %v490 = vpack.c.b16 %v463, %v460
    %v491 = vpack.c.b16 %v464, %v461
    %v492 = vpack.c.b16 %v465, %v462
    %v493 = vpack.c.b16 %v469, %v466
    %v494 = vpack.c.b16 %v470, %v467
    %v495 = vpack.c.b16 %v471, %v468
    %520 = vmatpush.bf16.msra.mxu0 %v493
    %521 = vmatpush.bf16.msra.mxu0 %v490
    %522 = vmatpush.bf16.msra.mxu0 %v487
    %523 = vmatpush.bf16.msra.mxu0 %v484
    %524 = vmatpush.bf16.msra.mxu0 %v481
    %525 = vmatpush.bf16.msra.mxu0 %v478
    %526 = vmatpush.bf16.msra.mxu0 %v475
    %527 = vmatpush.bf16.msra.mxu0 %v472
    %528 = vmatmul.f32.gmra.mxu0 %v354
    %v529 = vpop.f32.mrf.mxu0
    %v530 = vadd.f32 0.0, %v529
    %531 = vmatmul.f32.gmra.mxu0 %v355
    %v532 = vpop.f32.mrf.mxu0
    %v533 = vadd.f32 0.0, %v532
    %534 = vmatmul.f32.gmra.mxu0 %v356
    %v535 = vpop.f32.mrf.mxu0
    %v536 = vadd.f32 0.0, %v535
    %537 = vmatmul.f32.gmra.mxu0 %v357
    %v538 = vpop.f32.mrf.mxu0
    %v539 = vadd.f32 0.0, %v538
    %540 = vmatmul.f32.gmra.mxu0 %v358
    %v541 = vpop.f32.mrf.mxu0
    %v542 = vadd.f32 0.0, %v541
    %543 = vmatmul.f32.gmra.mxu0 %v359
    %v544 = vpop.f32.mrf.mxu0
    %v545 = vadd.f32 0.0, %v544
    %546 = vdwg.mxu0
    %547 = vmatpush.bf16.msra.mxu0 %v494
    %548 = vmatpush.bf16.msra.mxu0 %v491
    %549 = vmatpush.bf16.msra.mxu0 %v488
    %550 = vmatpush.bf16.msra.mxu0 %v485
    %551 = vmatpush.bf16.msra.mxu0 %v482
    %552 = vmatpush.bf16.msra.mxu0 %v479
    %553 = vmatpush.bf16.msra.mxu0 %v476
    %554 = vmatpush.bf16.msra.mxu0 %v473
    %555 = vmatmul.f32.gmra.mxu0 %v354
    %v556 = vpop.f32.mrf.mxu0
    %v557 = vadd.f32 0.0, %v556
    %558 = vmatmul.f32.gmra.mxu0 %v355
    %v559 = vpop.f32.mrf.mxu0
    %v560 = vadd.f32 0.0, %v559
    %561 = vmatmul.f32.gmra.mxu0 %v356
    %v562 = vpop.f32.mrf.mxu0
    %v563 = vadd.f32 0.0, %v562
    %564 = vmatmul.f32.gmra.mxu0 %v357
    %v565 = vpop.f32.mrf.mxu0
    %v566 = vadd.f32 0.0, %v565
    %567 = vmatmul.f32.gmra.mxu0 %v358
    %v568 = vpop.f32.mrf.mxu0
    %v569 = vadd.f32 0.0, %v568
    %570 = vmatmul.f32.gmra.mxu0 %v359
    %v571 = vpop.f32.mrf.mxu0
    %v572 = vadd.f32 0.0, %v571
    %573 = vdwg.mxu0
    %574 = vmatpush.bf16.msra.mxu0 %v495
    %575 = vmatpush.bf16.msra.mxu0 %v492
    %576 = vmatpush.bf16.msra.mxu0 %v489
    %577 = vmatpush.bf16.msra.mxu0 %v486
    %578 = vmatpush.bf16.msra.mxu0 %v483
    %579 = vmatpush.bf16.msra.mxu0 %v480
    %580 = vmatpush.bf16.msra.mxu0 %v477
    %581 = vmatpush.bf16.msra.mxu0 %v474
    %582 = vmatmul.f32.gmra.mxu0 %v354
    %v583 = vpop.f32.mrf.mxu0
    %v584 = vadd.f32 0.0, %v583
    %585 = vmatmul.f32.gmra.mxu0 %v355
    %v586 = vpop.f32.mrf.mxu0
    %v587 = vadd.f32 0.0, %v586
    %588 = vmatmul.f32.gmra.mxu0 %v356
    %v589 = vpop.f32.mrf.mxu0
    %v590 = vadd.f32 0.0, %v589
    %591 = vmatmul.f32.gmra.mxu0 %v357
    %v592 = vpop.f32.mrf.mxu0
    %v593 = vadd.f32 0.0, %v592
    %594 = vmatmul.f32.gmra.mxu0 %v358
    %v595 = vpop.f32.mrf.mxu0
    %v596 = vadd.f32 0.0, %v595
    %597 = vmatmul.f32.gmra.mxu0 %v359
    %v598 = vpop.f32.mrf.mxu0
    %v599 = vadd.f32 0.0, %v598
    %600 = vdwg.mxu0
    %v601 = vperm.slane %v53, 2
    %v602 = vadd.f32 %v530, %v601
    %v603 = vadd.f32 %v533, %v601
    %v604 = vadd.f32 %v536, %v601
    %v605 = vadd.f32 %v539, %v601
    %v606 = vadd.f32 %v542, %v601
    %v607 = vadd.f32 %v545, %v601
    %v608 = vperm.slane %v53, 3
    %v609 = vadd.f32 %v557, %v608
    %v610 = vadd.f32 %v560, %v608
    %v611 = vadd.f32 %v563, %v608
    %v612 = vadd.f32 %v566, %v608
    %v613 = vadd.f32 %v569, %v608
    %v614 = vadd.f32 %v572, %v608
    %v615 = vperm.slane %v53, 4
    %v616 = vadd.f32 %v584, %v615
    %v617 = vadd.f32 %v587, %v615
    %v618 = vadd.f32 %v590, %v615
    %v619 = vadd.f32 %v593, %v615
    %v620 = vadd.f32 %v596, %v615
    %v621 = vadd.f32 %v599, %v615
    %622 = vmatpush.xpose.msra.mxu0 0.0
    %623 = vmatpush.xpose.msra.mxu0 0.0
    %624 = vmatpush.xpose.msra.mxu0 0.0
    %625 = vmatpush.xpose.msra.mxu0 0.0
    %626 = vmatpush.xpose.msra.mxu0 0.0
    %627 = vmatpush.xpose.msra.mxu0 0.0
    %628 = vmatpush.xpose.msra.mxu0 0.0
    %629 = vmatpush.xpose.msra.mxu0 0.0
    %630 = vmatpush.xpose.msra.mxu0 0.0
    %631 = vmatpush.xpose.msra.mxu0 0.0
    %632 = vmatpush.xpose.msra.mxu0 %v614
    %633 = vmatpush.xpose.msra.mxu0 %v613
    %634 = vmatpush.xpose.msra.mxu0 %v612
    %635 = vmatpush.xpose.msra.mxu0 %v611
    %636 = vmatpush.xpose.msra.mxu0 %v610
    %637 = vmatpush.xpose.msra.mxu0 %v609
    %638 = vmatmul.f32.gmra.mxu0 %v602
    %v639 = vpop.f32.mrf.mxu0
    %v640 = vadd.f32 0.0, %v639
    %641 = vmatmul.f32.gmra.mxu0 %v603
    %v642 = vpop.f32.mrf.mxu0
    %v643 = vadd.f32 0.0, %v642
    %644 = vmatmul.f32.gmra.mxu0 %v604
    %v645 = vpop.f32.mrf.mxu0
    %v646 = vadd.f32 0.0, %v645
    %647 = vmatmul.f32.gmra.mxu0 %v605
    %v648 = vpop.f32.mrf.mxu0
    %v649 = vadd.f32 0.0, %v648
    %650 = vmatmul.f32.gmra.mxu0 %v606
    %v651 = vpop.f32.mrf.mxu0
    %v652 = vadd.f32 0.0, %v651
    %653 = vmatmul.f32.gmra.mxu0 %v607
    %v654 = vpop.f32.mrf.mxu0
    %v655 = vadd.f32 0.0, %v654
    %656 = vdwg.mxu0
    %v657 = vmul.f32 %v640, 0.17677669
    %v658 = vmul.f32 %v643, 0.17677669
    %v659 = vmul.f32 %v646, 0.17677669
    %v660 = vmul.f32 %v649, 0.17677669
    %v661 = vmul.f32 %v652, 0.17677669
    %v662 = vmul.f32 %v655, 0.17677669
    %v663 = vadd.f32 %v657, %v67
    %v664 = vadd.f32 %v658, %v68
    %v665 = vadd.f32 %v659, %v69
    %v666 = vadd.f32 %v660, %v70
    %v667 = vadd.f32 %v661, %v71
    %v668 = vadd.f32 %v662, %v72
    %vm669 = vcmask 392192
    %v670 = vsel %vm669, %v663, -inf
    %671 = vmax.xlane.f32.xlu0 %v670
    %v672 = vpop.xlane.xlu0 %671
    %v673 = vsel %vm669, %v664, -inf
    %674 = vmax.xlane.f32.xlu0 %v673
    %v675 = vpop.xlane.xlu0 %674
    %v676 = vsel %vm669, %v665, -inf
    %677 = vmax.xlane.f32.xlu0 %v676
    %v678 = vpop.xlane.xlu0 %677
    %v679 = vsel %vm669, %v666, -inf
    %680 = vmax.xlane.f32.xlu0 %v679
    %v681 = vpop.xlane.xlu0 %680
    %v682 = vsel %vm669, %v667, -inf
    %683 = vmax.xlane.f32.xlu0 %v682
    %v684 = vpop.xlane.xlu0 %683
    %v685 = vsel %vm669, %v668, -inf
    %686 = vmax.xlane.f32.xlu0 %v685
    %v687 = vpop.xlane.xlu0 %686
    %v688 = vsub.f32 %v663, %v672
    %v689 = vsub.f32 %v664, %v675
    %v690 = vsub.f32 %v665, %v678
    %v691 = vsub.f32 %v666, %v681
    %v692 = vsub.f32 %v667, %v684
    %v693 = vsub.f32 %v668, %v687
    %v694 = vmul.f32 %v688, 1.442695
    %v695 = vpow.pop %v694
    %v696 = vmul.f32 %v689, 1.442695
    %v697 = vpow.pop %v696
    %v698 = vmul.f32 %v690, 1.442695
    %v699 = vpow.pop %v698
    %v700 = vmul.f32 %v691, 1.442695
    %v701 = vpow.pop %v700
    %v702 = vmul.f32 %v692, 1.442695
    %v703 = vpow.pop %v702
    %v704 = vmul.f32 %v693, 1.442695
    %v705 = vpow.pop %v704
    %v706 = vsel %vm669, %v695, 0.0
    %707 = vadd.xlane.f32.xlu0 %v706
    %v708 = vpop.xlane.xlu0 %707
    %v709 = vsel %vm669, %v697, 0.0
    %710 = vadd.xlane.f32.xlu0 %v709
    %v711 = vpop.xlane.xlu0 %710
    %v712 = vsel %vm669, %v699, 0.0
    %713 = vadd.xlane.f32.xlu0 %v712
    %v714 = vpop.xlane.xlu0 %713
    %v715 = vsel %vm669, %v701, 0.0
    %716 = vadd.xlane.f32.xlu0 %v715
    %v717 = vpop.xlane.xlu0 %716
    %v718 = vsel %vm669, %v703, 0.0
    %719 = vadd.xlane.f32.xlu0 %v718
    %v720 = vpop.xlane.xlu0 %719
    %v721 = vsel %vm669, %v705, 0.0
    %722 = vadd.xlane.f32.xlu0 %v721
    %v723 = vpop.xlane.xlu0 %722
    %v724 = vrcp.pop %v708
    %v725 = vrcp.pop %v711
    %v726 = vrcp.pop %v714
    %v727 = vrcp.pop %v717
    %v728 = vrcp.pop %v720
    %v729 = vrcp.pop %v723
    %v730 = vmul.f32 %v695, %v724
    %v731 = vmul.f32 %v697, %v725
    %v732 = vmul.f32 %v699, %v726
    %v733 = vmul.f32 %v701, %v727
    %v734 = vmul.f32 %v703, %v728
    %v735 = vmul.f32 %v705, %v729
    %v737 = vsel %vm669, %v730, 0
    %v740 = vsel %vm669, %v731, 0
    %v743 = vsel %vm669, %v732, 0
    %v746 = vsel %vm669, %v733, 0
    %v749 = vsel %vm669, %v734, 0
    %v752 = vsel %vm669, %v735, 0
    %754 = vmatpush.msra.mxu0 0.0
    %755 = vmatpush.msra.mxu0 0.0
    %756 = vmatpush.msra.mxu0 0.0
    %757 = vmatpush.msra.mxu0 0.0
    %758 = vmatpush.msra.mxu0 0.0
    %759 = vmatpush.msra.mxu0 0.0
    %760 = vmatpush.msra.mxu0 0.0
    %761 = vmatpush.msra.mxu0 0.0
    %762 = vmatpush.msra.mxu0 0.0
    %763 = vmatpush.msra.mxu0 0.0
    %764 = vmatpush.msra.mxu0 %v621
    %765 = vmatpush.msra.mxu0 %v620
    %766 = vmatpush.msra.mxu0 %v619
    %767 = vmatpush.msra.mxu0 %v618
    %768 = vmatpush.msra.mxu0 %v617
    %769 = vmatpush.msra.mxu0 %v616
    %770 = vmatmul.f32.gmra.mxu0 %v737
    %v771 = vpop.f32.mrf.mxu0
    %v772 = vadd.f32 0.0, %v771
    %773 = vmatmul.f32.gmra.mxu0 %v740
    %v774 = vpop.f32.mrf.mxu0
    %v775 = vadd.f32 0.0, %v774
    %776 = vmatmul.f32.gmra.mxu0 %v743
    %v777 = vpop.f32.mrf.mxu0
    %v778 = vadd.f32 0.0, %v777
    %779 = vmatmul.f32.gmra.mxu0 %v746
    %v780 = vpop.f32.mrf.mxu0
    %v781 = vadd.f32 0.0, %v780
    %782 = vmatmul.f32.gmra.mxu0 %v749
    %v783 = vpop.f32.mrf.mxu0
    %v784 = vadd.f32 0.0, %v783
    %785 = vmatmul.f32.gmra.mxu0 %v752
    %v786 = vpop.f32.mrf.mxu0
    %v787 = vadd.f32 0.0, %v786
    %788 = vdwg.mxu0
    %v789 = vld [vmem:[#allocation4 + $0xc] sm:$0xf]
    %v790 = vld [vmem:[#allocation4 + $0x28] sm:$0xf]
    %v791 = vld [vmem:[#allocation4 + $0x44] sm:$0xf]
    %v792 = vld [vmem:[#allocation4 + $0x60] sm:$0xf]
    %v793 = vld [vmem:[#allocation4 + $0x7c] sm:$0xf]
    %v794 = vld [vmem:[#allocation4 + $0x98] sm:$0xf]
    %v795 = vld [vmem:[#allocation4 + $0xb4] sm:$0xf]
    %v796 = vld [vmem:[#allocation4 + $0xd0] sm:$0xf]
    %v797 = vld [vmem:[#allocation4 + $0xec] sm:$0xf]
    %v798 = vld [vmem:[#allocation4 + $0x108] sm:$0xf]
    %v799 = vld [vmem:[#allocation4 + $0x124] sm:$0xf]
    %v800 = vld [vmem:[#allocation4 + $0x140] sm:$0xf]
    %v801 = vld [vmem:[#allocation4 + $0x15c] sm:$0xf]
    %v802 = vld [vmem:[#allocation4 + $0x178] sm:$0xf]
    %v803 = vld [vmem:[#allocation4 + $0x194] sm:$0xf]
    %v804 = vld [vmem:[#allocation4 + $0x1b0] sm:$0xf]
    %v805 = vperm.slane %v53, 5
    %v822 = vunpack.c.l.b16 %v789
    %v823 = vunpack.c.l.b16 %v790
    %v824 = vunpack.c.l.b16 %v791
    %v825 = vunpack.c.l.b16 %v792
    %v826 = vunpack.c.l.b16 %v793
    %v827 = vunpack.c.l.b16 %v794
    %v828 = vunpack.c.l.b16 %v795
    %v829 = vunpack.c.l.b16 %v796
    %v830 = vunpack.c.l.b16 %v797
    %v831 = vunpack.c.l.b16 %v798
    %v832 = vunpack.c.l.b16 %v799
    %v833 = vunpack.c.l.b16 %v800
    %v834 = vunpack.c.l.b16 %v801
    %v835 = vunpack.c.l.b16 %v802
    %v836 = vunpack.c.l.b16 %v803
    %v837 = vunpack.c.l.b16 %v804
    %v838 = vpack.c.b16 %v823, %v822
    %v839 = vpack.c.b16 %v825, %v824
    %v840 = vpack.c.b16 %v827, %v826
    %v841 = vpack.c.b16 %v829, %v828
    %v842 = vpack.c.b16 %v831, %v830
    %v843 = vpack.c.b16 %v833, %v832
    %v844 = vpack.c.b16 %v835, %v834
    %v845 = vpack.c.b16 %v837, %v836
    %854 = vmatpush.bf16.msra.mxu0 %v845
    %855 = vmatpush.bf16.msra.mxu0 %v844
    %856 = vmatpush.bf16.msra.mxu0 %v843
    %857 = vmatpush.bf16.msra.mxu0 %v842
    %858 = vmatpush.bf16.msra.mxu0 %v841
    %859 = vmatpush.bf16.msra.mxu0 %v840
    %860 = vmatpush.bf16.msra.mxu0 %v839
    %861 = vmatpush.bf16.msra.mxu0 %v838
    %862 = vmatmul.f32.gmra.mxu0 %v772
    %v863 = vpop.f32.mrf.mxu0
    %v864 = vadd.f32 %v805, %v863
    %865 = vmatmul.f32.gmra.mxu0 %v775
    %v866 = vpop.f32.mrf.mxu0
    %v867 = vadd.f32 %v805, %v866
    %868 = vmatmul.f32.gmra.mxu0 %v778
    %v869 = vpop.f32.mrf.mxu0
    %v870 = vadd.f32 %v805, %v869
    %871 = vmatmul.f32.gmra.mxu0 %v781
    %v872 = vpop.f32.mrf.mxu0
    %v873 = vadd.f32 %v805, %v872
    %874 = vmatmul.f32.gmra.mxu0 %v784
    %v875 = vpop.f32.mrf.mxu0
    %v876 = vadd.f32 %v805, %v875
    %877 = vmatmul.f32.gmra.mxu0 %v787
    %v878 = vpop.f32.mrf.mxu0
    %v879 = vadd.f32 %v805, %v878
    %880 = vdwg.mxu0
    %v881 = vadd.f32 %v354, %v864
    %v882 = vadd.f32 %v355, %v867
    %v883 = vadd.f32 %v356, %v870
    %v884 = vadd.f32 %v357, %v873
    %v885 = vadd.f32 %v358, %v876
    %v886 = vadd.f32 %v359, %v879
    %887 = vadd.xlane.f32.xlu0 %v881
    %v888 = vpop.xlane.xlu0 %887
    %889 = vadd.xlane.f32.xlu0 %v882
    %v890 = vpop.xlane.xlu0 %889
    %891 = vadd.xlane.f32.xlu0 %v883
    %v892 = vpop.xlane.xlu0 %891
    %893 = vadd.xlane.f32.xlu0 %v884
    %v894 = vpop.xlane.xlu0 %893
    %895 = vadd.xlane.f32.xlu0 %v885
    %v896 = vpop.xlane.xlu0 %895
    %897 = vadd.xlane.f32.xlu0 %v886
    %v898 = vpop.xlane.xlu0 %897
    %v899 = vmul.f32 %v881, %v881
    %v900 = vmul.f32 %v882, %v882
    %v901 = vmul.f32 %v883, %v883
    %v902 = vmul.f32 %v884, %v884
    %v903 = vmul.f32 %v885, %v885
    %v904 = vmul.f32 %v886, %v886
    %905 = vadd.xlane.f32.xlu0 %v899
    %v906 = vpop.xlane.xlu0 %905
    %907 = vadd.xlane.f32.xlu0 %v900
    %v908 = vpop.xlane.xlu0 %907
    %909 = vadd.xlane.f32.xlu0 %v901
    %v910 = vpop.xlane.xlu0 %909
    %911 = vadd.xlane.f32.xlu0 %v902
    %v912 = vpop.xlane.xlu0 %911
    %913 = vadd.xlane.f32.xlu0 %v903
    %v914 = vpop.xlane.xlu0 %913
    %915 = vadd.xlane.f32.xlu0 %v904
    %v916 = vpop.xlane.xlu0 %915
    %v917 = vmul.f32 %v888, 0.03125
    %v918 = vmul.f32 %v890, 0.03125
    %v919 = vmul.f32 %v892, 0.03125
    %v920 = vmul.f32 %v894, 0.03125
    %v921 = vmul.f32 %v896, 0.03125
    %v922 = vmul.f32 %v898, 0.03125
    %v923 = vmul.f32 %v906, 0.03125
    %v924 = vmul.f32 %v908, 0.03125
    %v925 = vmul.f32 %v910, 0.03125
    %v926 = vmul.f32 %v912, 0.03125
    %v927 = vmul.f32 %v914, 0.03125
    %v928 = vmul.f32 %v916, 0.03125
    %v929 = vmul.f32 %v917, %v917
    %v930 = vmul.f32 %v918, %v918
    %v931 = vmul.f32 %v919, %v919
    %v932 = vmul.f32 %v920, %v920
    %v933 = vmul.f32 %v921, %v921
    %v934 = vmul.f32 %v922, %v922
    %v935 = vsub.f32 %v923, %v929
    %v936 = vsub.f32 %v924, %v930
    %v937 = vsub.f32 %v925, %v931
    %v938 = vsub.f32 %v926, %v932
    %v939 = vsub.f32 %v927, %v933
    %v940 = vsub.f32 %v928, %v934
    %v941 = vmax.f32 %v935, 0.0
    %v942 = vmax.f32 %v936, 0.0
    %v943 = vmax.f32 %v937, 0.0
    %v944 = vmax.f32 %v938, 0.0
    %v945 = vmax.f32 %v939, 0.0
    %v946 = vmax.f32 %v940, 0.0
    %v947 = vsub.f32 %v881, %v917
    %v948 = vsub.f32 %v882, %v918
    %v949 = vsub.f32 %v883, %v919
    %v950 = vsub.f32 %v884, %v920
    %v951 = vsub.f32 %v885, %v921
    %v952 = vsub.f32 %v886, %v922
    %v953 = vadd.f32 %v941, 1e-12
    %v954 = vadd.f32 %v942, 1e-12
    %v955 = vadd.f32 %v943, 1e-12
    %v956 = vadd.f32 %v944, 1e-12
    %v957 = vadd.f32 %v945, 1e-12
    %v958 = vadd.f32 %v946, 1e-12
    %v959 = vrsqrt.pop %v953
    %v960 = vmul.f32 %v959, %v953
    %v961 = vmul.f32 %v960, %v959
    %v962 = vmul.f32 0.5, %v961
    %v963 = vsub.f32 1.5, %v962
    %v964 = vmul.f32 %v959, %v963
    %vm965 = vweird.f32 %v953
    %vm966 = vweird.f32 %v959
    %vm967 = vmor %vm965, %vm966
    %v968 = vsel %vm967, %v959, %v964
    %v969 = vrsqrt.pop %v954
    %v970 = vmul.f32 %v969, %v954
    %v971 = vmul.f32 %v970, %v969
    %v972 = vmul.f32 0.5, %v971
    %v973 = vsub.f32 1.5, %v972
    %v974 = vmul.f32 %v969, %v973
    %vm975 = vweird.f32 %v954
    %vm976 = vweird.f32 %v969
    %vm977 = vmor %vm975, %vm976
    %v978 = vsel %vm977, %v969, %v974
    %v979 = vrsqrt.pop %v955
    %v980 = vmul.f32 %v979, %v955
    %v981 = vmul.f32 %v980, %v979
    %v982 = vmul.f32 0.5, %v981
    %v983 = vsub.f32 1.5, %v982
    %v984 = vmul.f32 %v979, %v983
    %vm985 = vweird.f32 %v955
    %vm986 = vweird.f32 %v979
    %vm987 = vmor %vm985, %vm986
    %v988 = vsel %vm987, %v979, %v984
    %v989 = vrsqrt.pop %v956
    %v990 = vmul.f32 %v989, %v956
    %v991 = vmul.f32 %v990, %v989
    %v992 = vmul.f32 0.5, %v991
    %v993 = vsub.f32 1.5, %v992
    %v994 = vmul.f32 %v989, %v993
    %vm995 = vweird.f32 %v956
    %vm996 = vweird.f32 %v989
    %vm997 = vmor %vm995, %vm996
    %v998 = vsel %vm997, %v989, %v994
    %v999 = vrsqrt.pop %v957
    %v1000 = vmul.f32 %v999, %v957
    %v1001 = vmul.f32 %v1000, %v999
    %v1002 = vmul.f32 0.5, %v1001
    %v1003 = vsub.f32 1.5, %v1002
    %v1004 = vmul.f32 %v999, %v1003
    %vm1005 = vweird.f32 %v957
    %vm1006 = vweird.f32 %v999
    %vm1007 = vmor %vm1005, %vm1006
    %v1008 = vsel %vm1007, %v999, %v1004
    %v1009 = vrsqrt.pop %v958
    %v1010 = vmul.f32 %v1009, %v958
    %v1011 = vmul.f32 %v1010, %v1009
    %v1012 = vmul.f32 0.5, %v1011
    %v1013 = vsub.f32 1.5, %v1012
    %v1014 = vmul.f32 %v1009, %v1013
    %vm1015 = vweird.f32 %v958
    %vm1016 = vweird.f32 %v1009
    %vm1017 = vmor %vm1015, %vm1016
    %v1018 = vsel %vm1017, %v1009, %v1014
    %v1019 = vmul.f32 %v947, %v968
    %v1020 = vmul.f32 %v948, %v978
    %v1021 = vmul.f32 %v949, %v988
    %v1022 = vmul.f32 %v950, %v998
    %v1023 = vmul.f32 %v951, %v1008
    %v1024 = vmul.f32 %v952, %v1018
    %v1025 = vperm.slane %v53, 6
    %v1026 = vmul.f32 %v1019, %v1025
    %v1027 = vmul.f32 %v1020, %v1025
    %v1028 = vmul.f32 %v1021, %v1025
    %v1029 = vmul.f32 %v1022, %v1025
    %v1030 = vmul.f32 %v1023, %v1025
    %v1031 = vmul.f32 %v1024, %v1025
    %v1032 = vperm.slane %v53, 7
    %v1033 = vadd.f32 %v1026, %v1032
    %v1034 = vadd.f32 %v1027, %v1032
    %v1035 = vadd.f32 %v1028, %v1032
    %v1036 = vadd.f32 %v1029, %v1032
    %v1037 = vadd.f32 %v1030, %v1032
    %v1038 = vadd.f32 %v1031, %v1032
    %v1039 = vld [vmem:[#allocation4 + $0x10] sm:$0xf]
    %v1040 = vld [vmem:[#allocation4 + $0x2c] sm:$0xf]
    %v1041 = vld [vmem:[#allocation4 + $0x48] sm:$0xf]
    %v1042 = vld [vmem:[#allocation4 + $0x64] sm:$0xf]
    %v1043 = vld [vmem:[#allocation4 + $0x80] sm:$0xf]
    %v1044 = vld [vmem:[#allocation4 + $0x9c] sm:$0xf]
    %v1045 = vld [vmem:[#allocation4 + $0xb8] sm:$0xf]
    %v1046 = vld [vmem:[#allocation4 + $0xd4] sm:$0xf]
    %v1047 = vld [vmem:[#allocation4 + $0xf0] sm:$0xf]
    %v1048 = vld [vmem:[#allocation4 + $0x10c] sm:$0xf]
    %v1049 = vld [vmem:[#allocation4 + $0x128] sm:$0xf]
    %v1050 = vld [vmem:[#allocation4 + $0x144] sm:$0xf]
    %v1051 = vld [vmem:[#allocation4 + $0x160] sm:$0xf]
    %v1052 = vld [vmem:[#allocation4 + $0x17c] sm:$0xf]
    %v1053 = vld [vmem:[#allocation4 + $0x198] sm:$0xf]
    %v1054 = vld [vmem:[#allocation4 + $0x1b4] sm:$0xf]
    %v1055 = vperm.slane %v54, 0
    %v1072 = vunpack.c.l.b16 %v1039
    %v1073 = vunpack.c.l.b16 %v1040
    %v1074 = vunpack.c.l.b16 %v1041
    %v1075 = vunpack.c.l.b16 %v1042
    %v1076 = vunpack.c.l.b16 %v1043
    %v1077 = vunpack.c.l.b16 %v1044
    %v1078 = vunpack.c.l.b16 %v1045
    %v1079 = vunpack.c.l.b16 %v1046
    %v1080 = vunpack.c.l.b16 %v1047
    %v1081 = vunpack.c.l.b16 %v1048
    %v1082 = vunpack.c.l.b16 %v1049
    %v1083 = vunpack.c.l.b16 %v1050
    %v1084 = vunpack.c.l.b16 %v1051
    %v1085 = vunpack.c.l.b16 %v1052
    %v1086 = vunpack.c.l.b16 %v1053
    %v1087 = vunpack.c.l.b16 %v1054
    %v1088 = vpack.c.b16 %v1073, %v1072
    %v1089 = vpack.c.b16 %v1075, %v1074
    %v1090 = vpack.c.b16 %v1077, %v1076
    %v1091 = vpack.c.b16 %v1079, %v1078
    %v1092 = vpack.c.b16 %v1081, %v1080
    %v1093 = vpack.c.b16 %v1083, %v1082
    %v1094 = vpack.c.b16 %v1085, %v1084
    %v1095 = vpack.c.b16 %v1087, %v1086
    %1104 = vmatpush.bf16.msra.mxu0 %v1095
    %1105 = vmatpush.bf16.msra.mxu0 %v1094
    %1106 = vmatpush.bf16.msra.mxu0 %v1093
    %1107 = vmatpush.bf16.msra.mxu0 %v1092
    %1108 = vmatpush.bf16.msra.mxu0 %v1091
    %1109 = vmatpush.bf16.msra.mxu0 %v1090
    %1110 = vmatpush.bf16.msra.mxu0 %v1089
    %1111 = vmatpush.bf16.msra.mxu0 %v1088
    %1112 = vmatmul.f32.gmra.mxu0 %v1033
    %v1113 = vpop.f32.mrf.mxu0
    %v1114 = vadd.f32 %v1055, %v1113
    %1115 = vmatmul.f32.gmra.mxu0 %v1034
    %v1116 = vpop.f32.mrf.mxu0
    %v1117 = vadd.f32 %v1055, %v1116
    %1118 = vmatmul.f32.gmra.mxu0 %v1035
    %v1119 = vpop.f32.mrf.mxu0
    %v1120 = vadd.f32 %v1055, %v1119
    %1121 = vmatmul.f32.gmra.mxu0 %v1036
    %v1122 = vpop.f32.mrf.mxu0
    %v1123 = vadd.f32 %v1055, %v1122
    %1124 = vmatmul.f32.gmra.mxu0 %v1037
    %v1125 = vpop.f32.mrf.mxu0
    %v1126 = vadd.f32 %v1055, %v1125
    %1127 = vmatmul.f32.gmra.mxu0 %v1038
    %v1128 = vpop.f32.mrf.mxu0
    %v1129 = vadd.f32 %v1055, %v1128
    %1130 = vdwg.mxu0
    %v1131 = vmul.f32 %v1114, %v1114
    %v1132 = vmul.f32 %v1117, %v1117
    %v1133 = vmul.f32 %v1120, %v1120
    %v1134 = vmul.f32 %v1123, %v1123
    %v1135 = vmul.f32 %v1126, %v1126
    %v1136 = vmul.f32 %v1129, %v1129
    %v1137 = vmul.f32 %v1114, %v1131
    %v1138 = vmul.f32 %v1117, %v1132
    %v1139 = vmul.f32 %v1120, %v1133
    %v1140 = vmul.f32 %v1123, %v1134
    %v1141 = vmul.f32 %v1126, %v1135
    %v1142 = vmul.f32 %v1129, %v1136
    %v1143 = vmul.f32 %v1137, 0.044715
    %v1144 = vmul.f32 %v1138, 0.044715
    %v1145 = vmul.f32 %v1139, 0.044715
    %v1146 = vmul.f32 %v1140, 0.044715
    %v1147 = vmul.f32 %v1141, 0.044715
    %v1148 = vmul.f32 %v1142, 0.044715
    %v1149 = vadd.f32 %v1114, %v1143
    %v1150 = vadd.f32 %v1117, %v1144
    %v1151 = vadd.f32 %v1120, %v1145
    %v1152 = vadd.f32 %v1123, %v1146
    %v1153 = vadd.f32 %v1126, %v1147
    %v1154 = vadd.f32 %v1129, %v1148
    %v1155 = vmul.f32 %v1149, 0.7978846
    %v1156 = vmul.f32 %v1150, 0.7978846
    %v1157 = vmul.f32 %v1151, 0.7978846
    %v1158 = vmul.f32 %v1152, 0.7978846
    %v1159 = vmul.f32 %v1153, 0.7978846
    %v1160 = vmul.f32 %v1154, 0.7978846
    %v1161 = vtanh.pop %v1155
    %v1162 = vtanh.pop %v1156
    %v1163 = vtanh.pop %v1157
    %v1164 = vtanh.pop %v1158
    %v1165 = vtanh.pop %v1159
    %v1166 = vtanh.pop %v1160
    %v1167 = vadd.f32 %v1161, 1.0
    %v1168 = vadd.f32 %v1162, 1.0
    %v1169 = vadd.f32 %v1163, 1.0
    %v1170 = vadd.f32 %v1164, 1.0
    %v1171 = vadd.f32 %v1165, 1.0
    %v1172 = vadd.f32 %v1166, 1.0
    %v1173 = vmul.f32 %v1167, 0.5
    %v1174 = vmul.f32 %v1168, 0.5
    %v1175 = vmul.f32 %v1169, 0.5
    %v1176 = vmul.f32 %v1170, 0.5
    %v1177 = vmul.f32 %v1171, 0.5
    %v1178 = vmul.f32 %v1172, 0.5
    %v1179 = vmul.f32 %v1114, %v1173
    %v1180 = vmul.f32 %v1117, %v1174
    %v1181 = vmul.f32 %v1120, %v1175
    %v1182 = vmul.f32 %v1123, %v1176
    %v1183 = vmul.f32 %v1126, %v1177
    %v1184 = vmul.f32 %v1129, %v1178
    %v1185 = vld [vmem:[#allocation4 + $0x14] sm:$0xf]
    %v1186 = vld [vmem:[#allocation4 + $0x30] sm:$0xf]
    %v1187 = vld [vmem:[#allocation4 + $0x4c] sm:$0xf]
    %v1188 = vld [vmem:[#allocation4 + $0x68] sm:$0xf]
    %v1189 = vld [vmem:[#allocation4 + $0x84] sm:$0xf]
    %v1190 = vld [vmem:[#allocation4 + $0xa0] sm:$0xf]
    %v1191 = vld [vmem:[#allocation4 + $0xbc] sm:$0xf]
    %v1192 = vld [vmem:[#allocation4 + $0xd8] sm:$0xf]
    %v1193 = vld [vmem:[#allocation4 + $0xf4] sm:$0xf]
    %v1194 = vld [vmem:[#allocation4 + $0x110] sm:$0xf]
    %v1195 = vld [vmem:[#allocation4 + $0x12c] sm:$0xf]
    %v1196 = vld [vmem:[#allocation4 + $0x148] sm:$0xf]
    %v1197 = vld [vmem:[#allocation4 + $0x164] sm:$0xf]
    %v1198 = vld [vmem:[#allocation4 + $0x180] sm:$0xf]
    %v1199 = vld [vmem:[#allocation4 + $0x19c] sm:$0xf]
    %v1200 = vld [vmem:[#allocation4 + $0x1b8] sm:$0xf]
    %v1201 = vperm.slane %v54, 1
    %v1218 = vunpack.c.l.b16 %v1185
    %v1219 = vunpack.c.l.b16 %v1186
    %v1220 = vunpack.c.l.b16 %v1187
    %v1221 = vunpack.c.l.b16 %v1188
    %v1222 = vunpack.c.l.b16 %v1189
    %v1223 = vunpack.c.l.b16 %v1190
    %v1224 = vunpack.c.l.b16 %v1191
    %v1225 = vunpack.c.l.b16 %v1192
    %v1226 = vunpack.c.l.b16 %v1193
    %v1227 = vunpack.c.l.b16 %v1194
    %v1228 = vunpack.c.l.b16 %v1195
    %v1229 = vunpack.c.l.b16 %v1196
    %v1230 = vunpack.c.l.b16 %v1197
    %v1231 = vunpack.c.l.b16 %v1198
    %v1232 = vunpack.c.l.b16 %v1199
    %v1233 = vunpack.c.l.b16 %v1200
    %v1234 = vpack.c.b16 %v1219, %v1218
    %v1235 = vpack.c.b16 %v1221, %v1220
    %v1236 = vpack.c.b16 %v1223, %v1222
    %v1237 = vpack.c.b16 %v1225, %v1224
    %v1238 = vpack.c.b16 %v1227, %v1226
    %v1239 = vpack.c.b16 %v1229, %v1228
    %v1240 = vpack.c.b16 %v1231, %v1230
    %v1241 = vpack.c.b16 %v1233, %v1232
    %1250 = vmatpush.bf16.msra.mxu0 %v1241
    %1251 = vmatpush.bf16.msra.mxu0 %v1240
    %1252 = vmatpush.bf16.msra.mxu0 %v1239
    %1253 = vmatpush.bf16.msra.mxu0 %v1238
    %1254 = vmatpush.bf16.msra.mxu0 %v1237
    %1255 = vmatpush.bf16.msra.mxu0 %v1236
    %1256 = vmatpush.bf16.msra.mxu0 %v1235
    %1257 = vmatpush.bf16.msra.mxu0 %v1234
    %1258 = vmatmul.f32.gmra.mxu0 %v1179
    %v1259 = vpop.f32.mrf.mxu0
    %v1260 = vadd.f32 %v1201, %v1259
    %1261 = vmatmul.f32.gmra.mxu0 %v1180
    %v1262 = vpop.f32.mrf.mxu0
    %v1263 = vadd.f32 %v1201, %v1262
    %1264 = vmatmul.f32.gmra.mxu0 %v1181
    %v1265 = vpop.f32.mrf.mxu0
    %v1266 = vadd.f32 %v1201, %v1265
    %1267 = vmatmul.f32.gmra.mxu0 %v1182
    %v1268 = vpop.f32.mrf.mxu0
    %v1269 = vadd.f32 %v1201, %v1268
    %1270 = vmatmul.f32.gmra.mxu0 %v1183
    %v1271 = vpop.f32.mrf.mxu0
    %v1272 = vadd.f32 %v1201, %v1271
    %1273 = vmatmul.f32.gmra.mxu0 %v1184
    %v1274 = vpop.f32.mrf.mxu0
    %v1275 = vadd.f32 %v1201, %v1274
    %1276 = vdwg.mxu0
    %v1277 = vadd.f32 %v1033, %v1260
    %v1278 = vadd.f32 %v1034, %v1263
    %v1279 = vadd.f32 %v1035, %v1266
    %v1280 = vadd.f32 %v1036, %v1269
    %v1281 = vadd.f32 %v1037, %v1272
    %v1282 = vadd.f32 %v1038, %v1275
    %1283 = vadd.xlane.f32.xlu0 %v1277
    %v1284 = vpop.xlane.xlu0 %1283
    %1285 = vadd.xlane.f32.xlu0 %v1278
    %v1286 = vpop.xlane.xlu0 %1285
    %1287 = vadd.xlane.f32.xlu0 %v1279
    %v1288 = vpop.xlane.xlu0 %1287
    %1289 = vadd.xlane.f32.xlu0 %v1280
    %v1290 = vpop.xlane.xlu0 %1289
    %1291 = vadd.xlane.f32.xlu0 %v1281
    %v1292 = vpop.xlane.xlu0 %1291
    %1293 = vadd.xlane.f32.xlu0 %v1282
    %v1294 = vpop.xlane.xlu0 %1293
    %v1295 = vmul.f32 %v1277, %v1277
    %v1296 = vmul.f32 %v1278, %v1278
    %v1297 = vmul.f32 %v1279, %v1279
    %v1298 = vmul.f32 %v1280, %v1280
    %v1299 = vmul.f32 %v1281, %v1281
    %v1300 = vmul.f32 %v1282, %v1282
    %1301 = vadd.xlane.f32.xlu0 %v1295
    %v1302 = vpop.xlane.xlu0 %1301
    %1303 = vadd.xlane.f32.xlu0 %v1296
    %v1304 = vpop.xlane.xlu0 %1303
    %1305 = vadd.xlane.f32.xlu0 %v1297
    %v1306 = vpop.xlane.xlu0 %1305
    %1307 = vadd.xlane.f32.xlu0 %v1298
    %v1308 = vpop.xlane.xlu0 %1307
    %1309 = vadd.xlane.f32.xlu0 %v1299
    %v1310 = vpop.xlane.xlu0 %1309
    %1311 = vadd.xlane.f32.xlu0 %v1300
    %v1312 = vpop.xlane.xlu0 %1311
    %v1313 = vmul.f32 %v1284, 0.03125
    %v1314 = vmul.f32 %v1286, 0.03125
    %v1315 = vmul.f32 %v1288, 0.03125
    %v1316 = vmul.f32 %v1290, 0.03125
    %v1317 = vmul.f32 %v1292, 0.03125
    %v1318 = vmul.f32 %v1294, 0.03125
    %v1319 = vmul.f32 %v1302, 0.03125
    %v1320 = vmul.f32 %v1304, 0.03125
    %v1321 = vmul.f32 %v1306, 0.03125
    %v1322 = vmul.f32 %v1308, 0.03125
    %v1323 = vmul.f32 %v1310, 0.03125
    %v1324 = vmul.f32 %v1312, 0.03125
    %v1325 = vmul.f32 %v1313, %v1313
    %v1326 = vmul.f32 %v1314, %v1314
    %v1327 = vmul.f32 %v1315, %v1315
    %v1328 = vmul.f32 %v1316, %v1316
    %v1329 = vmul.f32 %v1317, %v1317
    %v1330 = vmul.f32 %v1318, %v1318
    %v1331 = vsub.f32 %v1319, %v1325
    %v1332 = vsub.f32 %v1320, %v1326
    %v1333 = vsub.f32 %v1321, %v1327
    %v1334 = vsub.f32 %v1322, %v1328
    %v1335 = vsub.f32 %v1323, %v1329
    %v1336 = vsub.f32 %v1324, %v1330
    %v1337 = vmax.f32 %v1331, 0.0
    %v1338 = vmax.f32 %v1332, 0.0
    %v1339 = vmax.f32 %v1333, 0.0
    %v1340 = vmax.f32 %v1334, 0.0
    %v1341 = vmax.f32 %v1335, 0.0
    %v1342 = vmax.f32 %v1336, 0.0
    %v1343 = vsub.f32 %v1277, %v1313
    %v1344 = vsub.f32 %v1278, %v1314
    %v1345 = vsub.f32 %v1279, %v1315
    %v1346 = vsub.f32 %v1280, %v1316
    %v1347 = vsub.f32 %v1281, %v1317
    %v1348 = vsub.f32 %v1282, %v1318
    %v1349 = vadd.f32 %v1337, 1e-12
    %v1350 = vadd.f32 %v1338, 1e-12
    %v1351 = vadd.f32 %v1339, 1e-12
    %v1352 = vadd.f32 %v1340, 1e-12
    %v1353 = vadd.f32 %v1341, 1e-12
    %v1354 = vadd.f32 %v1342, 1e-12
    %v1355 = vrsqrt.pop %v1349
    %v1356 = vmul.f32 %v1355, %v1349
    %v1357 = vmul.f32 %v1356, %v1355
    %v1358 = vmul.f32 0.5, %v1357
    %v1359 = vsub.f32 1.5, %v1358
    %v1360 = vmul.f32 %v1355, %v1359
    %vm1361 = vweird.f32 %v1349
    %vm1362 = vweird.f32 %v1355
    %vm1363 = vmor %vm1361, %vm1362
    %v1364 = vsel %vm1363, %v1355, %v1360
    %v1365 = vrsqrt.pop %v1350
    %v1366 = vmul.f32 %v1365, %v1350
    %v1367 = vmul.f32 %v1366, %v1365
    %v1368 = vmul.f32 0.5, %v1367
    %v1369 = vsub.f32 1.5, %v1368
    %v1370 = vmul.f32 %v1365, %v1369
    %vm1371 = vweird.f32 %v1350
    %vm1372 = vweird.f32 %v1365
    %vm1373 = vmor %vm1371, %vm1372
    %v1374 = vsel %vm1373, %v1365, %v1370
    %v1375 = vrsqrt.pop %v1351
    %v1376 = vmul.f32 %v1375, %v1351
    %v1377 = vmul.f32 %v1376, %v1375
    %v1378 = vmul.f32 0.5, %v1377
    %v1379 = vsub.f32 1.5, %v1378
    %v1380 = vmul.f32 %v1375, %v1379
    %vm1381 = vweird.f32 %v1351
    %vm1382 = vweird.f32 %v1375
    %vm1383 = vmor %vm1381, %vm1382
    %v1384 = vsel %vm1383, %v1375, %v1380
    %v1385 = vrsqrt.pop %v1352
    %v1386 = vmul.f32 %v1385, %v1352
    %v1387 = vmul.f32 %v1386, %v1385
    %v1388 = vmul.f32 0.5, %v1387
    %v1389 = vsub.f32 1.5, %v1388
    %v1390 = vmul.f32 %v1385, %v1389
    %vm1391 = vweird.f32 %v1352
    %vm1392 = vweird.f32 %v1385
    %vm1393 = vmor %vm1391, %vm1392
    %v1394 = vsel %vm1393, %v1385, %v1390
    %v1395 = vrsqrt.pop %v1353
    %v1396 = vmul.f32 %v1395, %v1353
    %v1397 = vmul.f32 %v1396, %v1395
    %v1398 = vmul.f32 0.5, %v1397
    %v1399 = vsub.f32 1.5, %v1398
    %v1400 = vmul.f32 %v1395, %v1399
    %vm1401 = vweird.f32 %v1353
    %vm1402 = vweird.f32 %v1395
    %vm1403 = vmor %vm1401, %vm1402
    %v1404 = vsel %vm1403, %v1395, %v1400
    %v1405 = vrsqrt.pop %v1354
    %v1406 = vmul.f32 %v1405, %v1354
    %v1407 = vmul.f32 %v1406, %v1405
    %v1408 = vmul.f32 0.5, %v1407
    %v1409 = vsub.f32 1.5, %v1408
    %v1410 = vmul.f32 %v1405, %v1409
    %vm1411 = vweird.f32 %v1354
    %vm1412 = vweird.f32 %v1405
    %vm1413 = vmor %vm1411, %vm1412
    %v1414 = vsel %vm1413, %v1405, %v1410
    %v1415 = vmul.f32 %v1343, %v1364
    %v1416 = vmul.f32 %v1344, %v1374
    %v1417 = vmul.f32 %v1345, %v1384
    %v1418 = vmul.f32 %v1346, %v1394
    %v1419 = vmul.f32 %v1347, %v1404
    %v1420 = vmul.f32 %v1348, %v1414
    %v1421 = vperm.slane %v54, 2
    %v1422 = vmul.f32 %v1415, %v1421
    %v1423 = vmul.f32 %v1416, %v1421
    %v1424 = vmul.f32 %v1417, %v1421
    %v1425 = vmul.f32 %v1418, %v1421
    %v1426 = vmul.f32 %v1419, %v1421
    %v1427 = vmul.f32 %v1420, %v1421
    %v1428 = vperm.slane %v54, 3
    %v1429 = vadd.f32 %v1422, %v1428
    %v1430 = vadd.f32 %v1423, %v1428
    %v1431 = vadd.f32 %v1424, %v1428
    %v1432 = vadd.f32 %v1425, %v1428
    %v1433 = vadd.f32 %v1426, %v1428
    %v1434 = vadd.f32 %v1427, %v1428
    %v1435 = vld [vmem:[#allocation4 + $0x18] sm:$0xf]
    %v1436 = vld [vmem:[#allocation4 + $0x34] sm:$0xf]
    %v1437 = vld [vmem:[#allocation4 + $0x50] sm:$0xf]
    %v1438 = vld [vmem:[#allocation4 + $0x6c] sm:$0xf]
    %v1439 = vld [vmem:[#allocation4 + $0x88] sm:$0xf]
    %v1440 = vld [vmem:[#allocation4 + $0xa4] sm:$0xf]
    %v1441 = vld [vmem:[#allocation4 + $0xc0] sm:$0xf]
    %v1442 = vld [vmem:[#allocation4 + $0xdc] sm:$0xf]
    %v1443 = vld [vmem:[#allocation4 + $0xf8] sm:$0xf]
    %v1444 = vld [vmem:[#allocation4 + $0x114] sm:$0xf]
    %v1445 = vld [vmem:[#allocation4 + $0x130] sm:$0xf]
    %v1446 = vld [vmem:[#allocation4 + $0x14c] sm:$0xf]
    %v1447 = vld [vmem:[#allocation4 + $0x168] sm:$0xf]
    %v1448 = vld [vmem:[#allocation4 + $0x184] sm:$0xf]
    %v1449 = vld [vmem:[#allocation4 + $0x1a0] sm:$0xf]
    %v1450 = vld [vmem:[#allocation4 + $0x1bc] sm:$0xf]
    %v1451 = vperm.slane %v54, 4
    %v1458 = vrot.slane %v1430, 7
    %vm1459 = vcmask 1041409
    %v1460 = vsel %vm1459, %v1458, %v1429
    %v1461 = vrot.slane %v1431, 6
    %vm1462 = vcmask 1042434
    %v1463 = vsel %vm1462, %v1461, %v1460
    %v1464 = vrot.slane %v1432, 5
    %vm1465 = vcmask 1043459
    %v1466 = vsel %vm1465, %v1464, %v1463
    %v1467 = vrot.slane %v1433, 4
    %vm1468 = vcmask 1044484
    %v1469 = vsel %vm1468, %v1467, %v1466
    %v1470 = vrot.slane %v1434, 3
    %vm1471 = vcmask 1045509
    %v1472 = vsel %vm1471, %v1470, %v1469
    %v1490 = vunpack.c.l.b16 %v1435
    %v1491 = vunpack.c.l.b16 %v1436
    %v1492 = vunpack.c.l.b16 %v1437
    %v1493 = vunpack.c.l.b16 %v1438
    %v1494 = vunpack.c.l.b16 %v1439
    %v1495 = vunpack.c.l.b16 %v1440
    %v1496 = vunpack.c.l.b16 %v1441
    %v1497 = vunpack.c.l.b16 %v1442
    %v1498 = vunpack.c.l.b16 %v1443
    %v1499 = vunpack.c.l.b16 %v1444
    %v1500 = vunpack.c.l.b16 %v1445
    %v1501 = vunpack.c.l.b16 %v1446
    %v1502 = vunpack.c.l.b16 %v1447
    %v1503 = vunpack.c.l.b16 %v1448
    %v1504 = vunpack.c.l.b16 %v1449
    %v1505 = vunpack.c.l.b16 %v1450
    %v1506 = vpack.c.b16 %v1491, %v1490
    %v1507 = vpack.c.b16 %v1493, %v1492
    %v1508 = vpack.c.b16 %v1495, %v1494
    %v1509 = vpack.c.b16 %v1497, %v1496
    %v1510 = vpack.c.b16 %v1499, %v1498
    %v1511 = vpack.c.b16 %v1501, %v1500
    %v1512 = vpack.c.b16 %v1503, %v1502
    %v1513 = vpack.c.b16 %v1505, %v1504
    %1522 = vmatpush.bf16.msra.mxu0 %v1513
    %1523 = vmatpush.bf16.msra.mxu0 %v1512
    %1524 = vmatpush.bf16.msra.mxu0 %v1511
    %1525 = vmatpush.bf16.msra.mxu0 %v1510
    %1526 = vmatpush.bf16.msra.mxu0 %v1509
    %1527 = vmatpush.bf16.msra.mxu0 %v1508
    %1528 = vmatpush.bf16.msra.mxu0 %v1507
    %1529 = vmatpush.bf16.msra.mxu0 %v1506
    %1530 = vmatmul.f32.gmra.mxu0 %v1472
    %v1531 = vpop.f32.mrf.mxu0
    %v1532 = vadd.f32 %v1451, %v1531
    %1533 = vdwg.mxu0
    %v1534 = vtanh.pop %v1532
    %v1535 = vmul.f32 %v1534, %v1534
    %vm1536 = vcmask 1045504
    %v1537 = vsel %vm1536, %v1535, 0.0
    %1538 = vadd.xlane.f32.xlu0 %v1537
    %v1539 = vpop.xlane.xlu0 %1538
    %v1540 = vmax.f32 %v1539, 1e-24
    %v1541 = vrsqrt.pop %v1540
    %v1542 = vmul.f32 %v1541, %v1540
    %v1543 = vmul.f32 %v1542, %v1541
    %v1544 = vmul.f32 0.5, %v1543
    %v1545 = vsub.f32 1.5, %v1544
    %v1546 = vmul.f32 %v1541, %v1545
    %vm1547 = vweird.f32 %v1540
    %vm1548 = vweird.f32 %v1541
    %vm1549 = vmor %vm1547, %vm1548
    %v1550 = vsel %vm1549, %v1541, %v1546
    %v1551 = vmul.f32 %v1534, %v1550
    %1552 = vst [vmem:[%s5] sm:$0x3f] %v1551
    // Predicated region
    $region30: #{_encode_triplet.1} parent=1 // pred_check
      _
    $region31: #{_encode_triplet.1} parent=1 // pred_check_branch
      %1554 = sbr.rel (0) target = $region33
    $region32: #{_encode_triplet.1} parent=1 // pred_region
      _
    $region33: #{_encode_triplet.1} parent=1 // pred_fallthru
      _
    // Predicated region
    $region34: #{_encode_triplet.1} parent=1 // pred_check
      _
    $region35: #{_encode_triplet.1} parent=1 // pred_check_branch
      %1556 = sbr.rel (0) target = $region37
    $region36: #{_encode_triplet.1} parent=1 // pred_region
      _
    $region37: #{_encode_triplet.1} parent=1 // pred_fallthru
      _
    %1557 = vsyncpa [#allocation3], 1
    %1558 = vsyncpa [#allocation5], 1

</llo_original>
